<compile_context>
chip_gen: v5e
topology: v5e:2x2
jax: 0.10.0
libtpu: 0.0.40
codegen_flags: <defaults>
</compile_context>

<pallas_src>
import functools

import numpy as np
import jax
import jax.numpy as jnp
from jax.experimental import pallas as pl
from jax.experimental.pallas import tpu as pltpu

HP = 128       # node-state lane width (hidden padded to a full vreg lane group)
DEF_TQ = 256   # tuples per grid step


def _round_up(x, m):
    return (x + m - 1) // m * m


# ---------------------------------------------------------------------------
# Kernel
# ---------------------------------------------------------------------------
def _fused_mp_kernel(rid_ref, ar_ref,                    # scalar prefetch (SMEM)
                     gath_ref, idx_ref, node_ref,
                     w1t_ref, b1_ref, w2t_ref, b2_ref,
                     u1t_ref, ub1_ref, u2t_ref, ub2_ref,
                     *rest, amax, h, hp, hup, npad, rchunk, fuse_readout):
    """One message-passing iteration: packed relation MLP + arity-guarded one-hot
    scatter_add into a resident VMEM accumulator; update MLP (and, on the last
    iteration, the readout 'pre' MLP) fused into the finalize step."""
    del rid_ref  # consumed only by the weight/bias index_maps
    if fuse_readout:
        p1t_ref, pb1_ref, p2t_ref, pb2_ref, out_ref, pre_ref, acc_ref = rest
    else:
        out_ref, acc_ref = rest

    step = pl.program_id(0)

    @pl.when(step == 0)
    def _init():
        acc_ref[...] = jnp.zeros_like(acc_ref)

    # ---- relation MLP on one packed tile of TQ tuples ------------------------
    # x is (TQ, AHin) with the true amax*H features packed into one 128-lane block.
    x = gath_ref[0]                                                   # (TQ, AHin) bf16
    hid = jnp.maximum(
        jnp.dot(x, w1t_ref[0], preferred_element_type=jnp.float32) + b1_ref[0], 0.0)
    msg = (jnp.dot(hid.astype(jnp.bfloat16), w2t_ref[0],
                   preferred_element_type=jnp.float32) + b2_ref[0])
    msg = msg.astype(jnp.bfloat16)                                    # (TQ, amax*Hp)

    # ---- scatter_add into the resident accumulator ---------------------------
    arity = ar_ref[step]                                              # per-tile arity
    idxs = idx_ref[0]                                                 # (amax, TQ) i32
    tq = idxs.shape[1]
    iota_nodes = jax.lax.broadcasted_iota(jnp.int32, (npad, tq), 0)

    # Position 0 always exists (every active relation tile has arity >= 1).
    onehot0 = (iota_nodes == idxs[0:1, :]).astype(jnp.bfloat16)       # (Npad, TQ)
    acc_ref[...] += jnp.dot(onehot0, msg[:, :hp],
                            preferred_element_type=jnp.float32)

    # Positions >= 1 are skipped entirely on lower-arity tiles.
    for p in range(1, amax):
        @pl.when(p < arity)
        def _(p=p):
            onehot = (iota_nodes == idxs[p:p + 1, :]).astype(jnp.bfloat16)
            acc_ref[...] += jnp.dot(onehot, msg[:, p * hp:(p + 1) * hp],
                                    preferred_element_type=jnp.float32)

    # ---- finalize: update MLP (+ fused readout 'pre') on row chunks ----------
    @pl.when(step == pl.num_programs(0) - 1)
    def _finalize():
        u1t = u1t_ref[...]                                            # (2Hp, HUp) bf16
        for r0 in range(0, npad, rchunk):
            rows = pl.ds(r0, rchunk)
            s = acc_ref[rows, :].astype(jnp.bfloat16)                 # (R, Hp) sum_msg
            nd = node_ref[rows, :]                                    # (R, Hp) bf16
            hu = jnp.maximum(
                jnp.dot(s, u1t[:hp, :], preferred_element_type=jnp.float32)
                + jnp.dot(nd, u1t[hp:, :], preferred_element_type=jnp.float32)
                + ub1_ref[...], 0.0)                                  # (R, HUp)
            ns = (jnp.dot(hu.astype(jnp.bfloat16), u2t_ref[...],
                          preferred_element_type=jnp.float32) + ub2_ref[...])
            out_ref[rows, :] = ns.astype(jnp.bfloat16)
            if fuse_readout:
                nsb = ns.astype(jnp.bfloat16)
                hr = jnp.maximum(
                    jnp.dot(nsb, p1t_ref[...], preferred_element_type=jnp.float32)
                    + pb1_ref[...], 0.0)
                pre_ref[rows, :] = (jnp.dot(hr.astype(jnp.bfloat16), p2t_ref[...],
                                            preferred_element_type=jnp.float32)
                                    + pb2_ref[...])


# ---------------------------------------------------------------------------
# One-time parameter preparation (pad / transpose / cast -- once, not per call)
# ---------------------------------------------------------------------------
def _pack_mat_t(w, pad_rows, pad_cols):
    """PyTorch Linear weight (out, in) -> zero-padded W^T (pad_rows, pad_cols)."""
    wt = jnp.asarray(w, jnp.float32).T
    r, c = wt.shape
    return jnp.pad(wt, ((0, pad_rows - r), (0, pad_cols - c)))


def _pack_vec(b, pad):
    b = jnp.asarray(b, jnp.float32)
    return jnp.pad(b, (0, pad - b.shape[0])).reshape(1, pad)


def _pack_w2_t(w2, a, h, hp, amax, ahin):
    """W2 (aH, aH) -> W2^T with packed input rows (aH->AHin) and per-position
    128-lane padded output columns (aH -> amax*Hp) for lane-aligned scatter slices."""
    wt = jnp.asarray(w2, jnp.float32).T.reshape(a * h, a, h)
    wt = jnp.pad(wt, ((0, ahin - a * h), (0, amax - a), (0, hp - h)))
    return wt.reshape(ahin, amax * hp)


def _pack_b2(b2, a, h, hp, amax):
    b = jnp.asarray(b2, jnp.float32).reshape(a, h)
    b = jnp.pad(b, ((0, amax - a), (0, hp - h)))
    return b.reshape(1, amax * hp)


def _pack_u1_t(u1, h, hp, hup):
    """Update first Linear (2H,2H): split input into (sum_msg, node) Hp-padded blocks,
    pack the 2H output into HUp lanes."""
    wt = jnp.asarray(u1, jnp.float32).T.reshape(2, h, 2 * h)
    wt = jnp.pad(wt, ((0, 0), (0, hp - h), (0, hup - 2 * h)))
    return wt.reshape(2 * hp, hup)


def prepare_model(params, hidden, hp=HP):
    rel_entries = params["relations"]
    amax = 1
    for rel in sorted(rel_entries):
        e = rel_entries[rel]
        if e is not None:
            amax = max(amax, int(e[4]))
    ahin = _round_up(amax * hidden, 128)     # packed relation-MLP contraction width
    hup = _round_up(2 * hidden, 128)         # packed update-MLP hidden width

    slots, arities, w1t, b1, w2t, b2 = [], [], [], [], [], []
    for rel in sorted(rel_entries):
        e = rel_entries[rel]
        if e is None:
            continue
        rw1, rb1, rw2, rb2, a = e
        a = int(a)
        slots.append(rel)
        arities.append(a)
        w1t.append(_pack_mat_t(rw1, ahin, ahin).astype(jnp.bfloat16))
        b1.append(_pack_vec(rb1, ahin))
        w2t.append(_pack_w2_t(rw2, a, hidden, hp, amax, ahin).astype(jnp.bfloat16))
        b2.append(_pack_b2(rb2, a, hidden, hp, amax))

    if slots:
        w1t_all, b1_all = jnp.stack(w1t), jnp.stack(b1)
        w2t_all, b2_all = jnp.stack(w2t), jnp.stack(b2)
    else:  # degenerate: no relation module with arity > 0
        w1t_all = jnp.zeros((1, ahin, ahin), jnp.bfloat16)
        b1_all = jnp.zeros((1, 1, ahin), jnp.float32)
        w2t_all = jnp.zeros((1, ahin, amax * hp), jnp.bfloat16)
        b2_all = jnp.zeros((1, 1, amax * hp), jnp.float32)

    u1, ub1, u2, ub2 = params["update"]
    upd = dict(u1t=_pack_u1_t(u1, hidden, hp, hup).astype(jnp.bfloat16),
               ub1=_pack_vec(ub1, hup),
               u2t=_pack_mat_t(u2, hup, hp).astype(jnp.bfloat16),
               ub2=_pack_vec(ub2, hp))

    p1, pb1, p2, pb2, q1, qb1, q2, qb2 = params["value_readout"]
    vro = dict(p1t=_pack_mat_t(p1, hp, hp).astype(jnp.bfloat16),
               pb1=_pack_vec(pb1, hp),
               p2t=_pack_mat_t(p2, hp, hp).astype(jnp.bfloat16),
               pb2=_pack_vec(pb2, hp),
               raw_pre=(p1, pb1, p2, pb2),
               post=(q1, qb1, q2, qb2))

    return dict(hidden=hidden, hp=hp, ahin=ahin, hup=hup, amax=amax,
                slots=slots, arities=arities,
                w1t=w1t_all, b1=b1_all, w2t=w2t_all, b2=b2_all,
                update=upd, value_readout=vro)


# ---------------------------------------------------------------------------
# Per-forward glue
# ---------------------------------------------------------------------------
def prepare_relation_tiles(prep, relations_dict, num_nodes, tq):
    """Flat PyTorch-style index tensors -> padded tuple tiles:
       idx_gather  (num_tiles, TQ, amax)  for the wrapper-side gather,
       idx_scatter (num_tiles, amax, TQ)  lane-major rows for the in-kernel one-hot,
       rel_ids / arities (num_tiles,)     scalar-prefetched per tile."""
    amax = prep["amax"]
    dummy = num_nodes                        # scratch node row; dropped at the end
    g_tiles, s_tiles, rel_ids, ars = [], [], [], []
    for slot, rel in enumerate(prep["slots"]):
        if rel not in relations_dict:
            continue
        a = prep["arities"][slot]
        values = np.asarray(relations_dict[rel]).reshape(-1, a)
        t = values.shape[0]
        if t == 0:
            continue
        tpad = _round_up(t, tq)
        idx = np.full((tpad, amax), dummy, np.int32)
        idx[:t, :a] = values
        ntiles = tpad // tq
        g = idx.reshape(ntiles, tq, amax)
        g_tiles.append(g)
        s_tiles.append(np.ascontiguousarray(g.transpose(0, 2, 1)))
        rel_ids += [slot] * ntiles
        ars += [a] * ntiles
    if not g_tiles:                          # no active relation: one all-dummy tile
        g = np.full((1, tq, amax), dummy, np.int32)
        g_tiles.append(g)
        s_tiles.append(np.ascontiguousarray(g.transpose(0, 2, 1)))
        rel_ids, ars = [0], [1]
    return (jnp.asarray(np.concatenate(g_tiles, 0)),
            jnp.asarray(np.concatenate(s_tiles, 0)),
            jnp.asarray(np.asarray(rel_ids, np.int32)),
            jnp.asarray(np.asarray(ars, np.int32)))


def _vmem_limit_bytes(npad, hp, hup, amax, ahin, tq, rchunk, fuse_readout):
    f32, bf16 = 4, 2
    resident = (npad * hp * f32                      # acc scratch
                + 2 * npad * hp * bf16               # node in, nodes out
                + (npad * hp * f32 if fuse_readout else 0)   # readout 'pre' out
                + (2 * hp * hup + hup * hp) * bf16   # update weights
                + (2 * hp * hp * bf16 if fuse_readout else 0)
                + 8 * 8 * max(hup, hp) * f32)        # biases (sublane padded)
    per_step = (tq * ahin * bf16                     # gathered tile
                + 8 * tq * 4                         # idx tile (amax -> 8 sublanes)
                + (ahin * ahin + ahin * amax * hp) * bf16
                + 8 * (ahin + amax * hp) * f32)
    temps = (npad * tq * (f32 + bf16)                # iota + one-hot
             + tq * amax * hp * (f32 + bf16)         # msg
             + 2 * tq * ahin * f32                   # x / hidden f32 temps
             + npad * hp * f32                       # scatter partial
             + rchunk * (hup + 3 * hp) * f32)        # finalize chunk temps
    est = resident + 2 * per_step + temps            # x2 = double buffering
    cap = 64 * 1024 * 1024                           # v7x-safe default
    try:
        cap = int(getattr(pltpu.get_tpu_info(), "vmem_capacity_bytes", cap))
    except Exception:
        pass
    limit = min(max(int(1.5 * est), 32 * 1024 * 1024), cap - 8 * 1024 * 1024)
    return int(max(limit, 16 * 1024 * 1024))


def mp_iteration(prep, tiles, node_pad, *, fuse_readout, tq):
    """One RelationMessagePassing.forward, fused into a single pallas_call.
    When fuse_readout=True the readout 'pre' MLP output is produced as well."""
    idx_gather, idx_scatter, rel_ids, arities = tiles
    npad, hp = node_pad.shape
    num_tiles = idx_gather.shape[0]
    h, amax, ahin, hup = prep["hidden"], prep["amax"], prep["ahin"], prep["hup"]
    rchunk = min(npad, 2048)

    # Wrapper-side index gather -> packed lane-dense (num_tiles, TQ, AHin) bf16 tiles.
    g = jnp.take(node_pad, idx_gather.reshape(-1), axis=0)[:, :h]
    g = g.reshape(num_tiles, tq, amax * h)
    if ahin > amax * h:
        g = jnp.pad(g, ((0, 0), (0, 0), (0, ahin - amax * h)))

    kernel = functools.partial(_fused_mp_kernel, amax=amax, h=h, hp=hp, hup=hup,
                               npad=npad, rchunk=rchunk, fuse_readout=fuse_readout)

    in_specs = [
        pl.BlockSpec((1, tq, ahin), lambda i, rid, ar: (i, 0, 0)),          # gathered
        pl.BlockSpec((1, amax, tq), lambda i, rid, ar: (i, 0, 0)),          # idx tile
        pl.BlockSpec((npad, hp), lambda i, rid, ar: (0, 0)),                # node states
        pl.BlockSpec((1, ahin, ahin), lambda i, rid, ar: (rid[i], 0, 0)),   # W1^T
        pl.BlockSpec((1, 1, ahin), lambda i, rid, ar: (rid[i], 0, 0)),      # b1
        pl.BlockSpec((1, ahin, amax * hp), lambda i, rid, ar: (rid[i], 0, 0)),  # W2^T
        pl.BlockSpec((1, 1, amax * hp), lambda i, rid, ar: (rid[i], 0, 0)),     # b2
        pl.BlockSpec((2 * hp, hup), lambda i, rid, ar: (0, 0)),             # U1^T
        pl.BlockSpec((1, hup), lambda i, rid, ar: (0, 0)),                  # Ub1
        pl.BlockSpec((hup, hp), lambda i, rid, ar: (0, 0)),                 # U2^T
        pl.BlockSpec((1, hp), lambda i, rid, ar: (0, 0)),                   # Ub2
    ]
    args = [rel_ids, arities, g, idx_scatter, node_pad,
            prep["w1t"], prep["b1"], prep["w2t"], prep["b2"],
            prep["update"]["u1t"], prep["update"]["ub1"],
            prep["update"]["u2t"], prep["update"]["ub2"]]
    out_shape = jax.ShapeDtypeStruct((npad, hp), jnp.bfloat16)
    out_specs = pl.BlockSpec((npad, hp), lambda i, rid, ar: (0, 0))
    if fuse_readout:
        ro = prep["value_readout"]
        in_specs += [pl.BlockSpec((hp, hp), lambda i, rid, ar: (0, 0)),
                     pl.BlockSpec((1, hp), lambda i, rid, ar: (0, 0)),
                     pl.BlockSpec((hp, hp), lambda i, rid, ar: (0, 0)),
                     pl.BlockSpec((1, hp), lambda i, rid, ar: (0, 0))]
        args += [ro["p1t"], ro["pb1"], ro["p2t"], ro["pb2"]]
        out_shape = (out_shape, jax.ShapeDtypeStruct((npad, hp), jnp.float32))
        out_specs = (out_specs, pl.BlockSpec((npad, hp), lambda i, rid, ar: (0, 0)))

    grid_spec = pltpu.PrefetchScalarGridSpec(
        num_scalar_prefetch=2,
        grid=(num_tiles,),
        in_specs=in_specs,
        out_specs=out_specs,
        scratch_shapes=[pltpu.VMEM((npad, hp), jnp.float32)],               # sum_msg
    )
    return pl.pallas_call(
        kernel,
        out_shape=out_shape,
        grid_spec=grid_spec,
        compiler_params=pltpu.CompilerParams(
            dimension_semantics=("arbitrary",),   # reduction into shared accumulator
            vmem_limit_bytes=_vmem_limit_bytes(npad, hp, hup, amax, ahin, tq,
                                               rchunk, fuse_readout),
        ),
    )(*args)


def readout_tail(ro, batch_num_objects, pre):
    """Per-graph aggregation (cumsum + boundary diff) + post MLP on [num_graphs, H]."""
    cum = jnp.cumsum(pre, axis=0)
    bidx = jnp.cumsum(jnp.asarray(batch_num_objects, jnp.int32)) - 1
    cs = cum[bidx]
    agg = jnp.concatenate([cs[:1], cs[1:] - cs[:-1]], axis=0)
    q1, qb1, q2, qb2 = ro["post"]
    hq = jnp.maximum(agg @ q1.T + qb1, 0.0)
    return hq @ q2.T + qb2                       # (num_graphs, 1)


def model_forward(prep, relations_dict, batch_num_objects, init_nodes,
                  iterations, tq=DEF_TQ):
    hidden, hp = prep["hidden"], prep["hp"]
    n = init_nodes.shape[0]
    n1 = n + 1                                   # +1 scratch row absorbs padded tuples
    npad = _round_up(n1, 2048) if n1 > 2048 else _round_up(n1, 8)
    node_pad = jnp.zeros((npad, hp), jnp.bfloat16)
    node_pad = node_pad.at[:n, :hidden].set(init_nodes.astype(jnp.bfloat16))

    if iterations == 0:                          # edge case: readout on the init states
        p1, pb1, p2, pb2 = prep["value_readout"]["raw_pre"]
        pre = jnp.maximum(init_nodes @ p1.T + pb1, 0.0) @ p2.T + pb2
        value = readout_tail(prep["value_readout"], batch_num_objects, pre)
        return value, value, init_nodes

    tiles = prepare_relation_tiles(prep, relations_dict, n, tq)
    pre_pad = None
    for it in range(iterations):                 # _pass_messages
        last = it == iterations - 1
        res = mp_iteration(prep, tiles, node_pad, fuse_readout=last, tq=tq)
        if last:
            node_pad, pre_pad = res
        else:
            node_pad = res

    node_states = node_pad[:n, :hidden].astype(jnp.float32)
    value = readout_tail(prep["value_readout"], batch_num_objects,
                         pre_pad[:n, :hidden])
    solvable = value                             # original forward applies value_readout twice
    return value, solvable, node_states


# ---------------------------------------------------------------------------
# Pure-JAX f32 reference (mirrors the PyTorch forward exactly)
# ---------------------------------------------------------------------------
def reference_forward(params, relations_dict, batch_num_objects, init_nodes, iterations):
    hidden = params["hidden"]
    node_states = init_nodes
    for _ in range(iterations):
        sum_msg = jnp.zeros_like(node_states)
        for rel in sorted(params["relations"]):
            entry = params["relations"][rel]
            if entry is not None and rel in relations_dict:
                w1, b1, w2, b2, arity = entry
                values = relations_dict[rel]
                inp = node_states[values].reshape(-1, arity * hidden)
                hmid = jnp.maximum(inp @ w1.T + b1, 0.0)
                out = (hmid @ w2.T + b2).reshape(-1, hidden)
                sum_msg = sum_msg.at[values].add(out)
        u1, ub1, u2, ub2 = params["update"]
        x = jnp.concatenate([sum_msg, node_states], axis=1)
        node_states = jnp.maximum(x @ u1.T + ub1, 0.0) @ u2.T + ub2
    p1, pb1, p2, pb2, q1, qb1, q2, qb2 = params["value_readout"]
    pre = jnp.maximum(node_states @ p1.T + pb1, 0.0) @ p2.T + pb2
    cum = jnp.cumsum(pre, axis=0)
    bidx = jnp.cumsum(jnp.asarray(batch_num_objects, jnp.int32)) - 1
    cs = cum[bidx]
    agg = jnp.concatenate([cs[:1], cs[1:] - cs[:-1]], axis=0)
    value = jnp.maximum(agg @ q1.T + qb1, 0.0) @ q2.T + qb2
    return value, value, node_states


# ---------------------------------------------------------------------------
# Deterministic parameter init (nn.Linear default: U(-1/sqrt(fan_in), 1/sqrt(fan_in)))
# ---------------------------------------------------------------------------
def linear_init(key, out_f, in_f):
    kw, kb = jax.random.split(key)
    bound = float(1.0 / (in_f ** 0.5))
    w = jax.random.uniform(kw, (out_f, in_f), jnp.float32, -bound, bound)
    b = jax.random.uniform(kb, (out_f,), jnp.float32, -bound, bound)
    return w, b


def readout_init(key, hidden):
    k = jax.random.split(key, 4)
    p1, pb1 = linear_init(k[0], hidden, hidden)
    p2, pb2 = linear_init(k[1], hidden, hidden)
    q1, qb1 = linear_init(k[2], hidden, hidden)
    q2, qb2 = linear_init(k[3], 1, hidden)
    return (p1, pb1, p2, pb2, q1, qb1, q2, qb2)


def init_params(key, relations_spec, hidden):
    params = {"relations": {}, "hidden": hidden}
    keys = jax.random.split(key, 2 * len(relations_spec) + 4)
    ki = 0
    for rel, arity in relations_spec:
        if arity * hidden > 0:
            w1, b1 = linear_init(keys[ki], arity * hidden, arity * hidden); ki += 1
            w2, b2 = linear_init(keys[ki], arity * hidden, arity * hidden); ki += 1
            params["relations"][rel] = (w1, b1, w2, b2, arity)
        else:
            params["relations"][rel] = None          # matches `mlp = None` for arity 0
            ki += 2
    u1, ub1 = linear_init(keys[ki], 2 * hidden, 2 * hidden); ki += 1
    u2, ub2 = linear_init(keys[ki], hidden, 2 * hidden); ki += 1
    params["update"] = (u1, ub1, u2, ub2)
    params["value_readout"] = readout_init(keys[ki], hidden); ki += 1
    params["solvable_readout"] = readout_init(keys[ki], hidden); ki += 1  # unused by forward (as in the original)
    return params


# ---------------------------------------------------------------------------
if __name__ == "__main__":
    hidden = 32
    iterations = 2
    # (relation_id, arity); arity-0 relation gets a None module, matching PyTorch.
    relations_spec = [(0, 1), (1, 2), (2, 0), (3, 3)]
    batch_num_objects = [7, 9]
    num_nodes = sum(batch_num_objects)               # 16

    root = jax.random.PRNGKey(0)
    k_params, k_init, k0, k1, k3 = jax.random.split(root, 5)
    params = init_params(k_params, relations_spec, hidden)

    # _initialize_nodes: [zeros | randn] halves (same draw used by both paths).
    half = hidden // 2 + hidden % 2
    init_nodes = jnp.concatenate(
        [jnp.zeros((num_nodes, half), jnp.float32),
         jax.random.normal(k_init, (num_nodes, hidden - half), jnp.float32)], axis=1)

    # Flat index tensors, PyTorch-style: length = num_tuples * arity.
    relations_dict = {
        0: jax.random.randint(k0, (8 * 1,), 0, num_nodes, jnp.int32),
        1: jax.random.randint(k1, (8 * 2,), 0, num_nodes, jnp.int32),
        3: jax.random.randint(k3, (8 * 3,), 0, num_nodes, jnp.int32),
        # relation 2 (arity 0) intentionally absent / skipped.
    }

    prep = prepare_model(params, hidden)              # pad/transpose/cast ONCE
    value, solvable, nodes_out = model_forward(prep, relations_dict, batch_num_objects,
                                               init_nodes, iterations, tq=DEF_TQ)
    value = jax.block_until_ready(value)

    ref_value, ref_solvable, ref_nodes = reference_forward(
        params, relations_dict, batch_num_objects, init_nodes, iterations)

    assert value.shape == (len(batch_num_objects), 1) and value.dtype == jnp.float32
    assert nodes_out.shape == (num_nodes, hidden)
    # bf16 node states + bf16 MXU operands (f32 accumulate) -> relaxed tolerance.
    for got, ref, name in ((nodes_out, ref_nodes, "node_states"),
                           (value, ref_value, "value"),
                           (solvable, ref_solvable, "solvable")):
        err = float(jnp.max(jnp.abs(got - ref)))
        assert jnp.allclose(got, ref, atol=6e-2, rtol=6e-2), f"{name} max abs err {err}"

    print("KERNEL_OK")
</pallas_src>

<mosaic_0001>
module attributes {stable_mosaic.version = 11 : i64} {
  func.func @_fused_mp_kernel(%arg0: i32, %arg1: memref<3xi32, #tpu.memory_space<smem>>, %arg2: memref<3xi32, #tpu.memory_space<smem>>, %arg3: memref<1x256x128xbf16, #tpu.memory_space<vmem>>, %arg4: memref<1x3x256xi32, #tpu.memory_space<vmem>>, %arg5: memref<24x128xbf16, #tpu.memory_space<vmem>>, %arg6: memref<1x128x128xbf16, #tpu.memory_space<vmem>>, %arg7: memref<1x1x128xf32, #tpu.memory_space<vmem>>, %arg8: memref<1x128x384xbf16, #tpu.memory_space<vmem>>, %arg9: memref<1x1x384xf32, #tpu.memory_space<vmem>>, %arg10: memref<256x128xbf16, #tpu.memory_space<vmem>>, %arg11: memref<1x128xf32, #tpu.memory_space<vmem>>, %arg12: memref<128x128xbf16, #tpu.memory_space<vmem>>, %arg13: memref<1x128xf32, #tpu.memory_space<vmem>>, %arg14: memref<24x128xbf16, #tpu.memory_space<vmem>>, %arg15: memref<24x128xf32, #tpu.memory_space<vmem>>) attributes {dimension_semantics = [#tpu.dimension_semantics<arbitrary>], iteration_bounds = array<i64: 3>, scalar_prefetch = 2 : i64, scratch_operands = 1 : i64, tpu.core_type = #tpu.core_type<tc>, window_params = [{transform_indices = @transform_0, window_bounds = array<i64: 1, 256, 128>}, {transform_indices = @transform_1, window_bounds = array<i64: 1, 3, 256>}, {pipeline_mode = #tpu.pipeline_mode<synchronous>, transform_indices = @transform_2, window_bounds = array<i64: 24, 128>}, {transform_indices = @transform_3, window_bounds = array<i64: 1, 128, 128>}, {transform_indices = @transform_4, window_bounds = array<i64: 1, 1, 128>}, {transform_indices = @transform_5, window_bounds = array<i64: 1, 128, 384>}, {transform_indices = @transform_6, window_bounds = array<i64: 1, 1, 384>}, {pipeline_mode = #tpu.pipeline_mode<synchronous>, transform_indices = @transform_7, window_bounds = array<i64: 256, 128>}, {pipeline_mode = #tpu.pipeline_mode<synchronous>, transform_indices = @transform_8, window_bounds = array<i64: 1, 128>}, {pipeline_mode = #tpu.pipeline_mode<synchronous>, transform_indices = @transform_9, window_bounds = array<i64: 128, 128>}, {pipeline_mode = #tpu.pipeline_mode<synchronous>, transform_indices = @transform_10, window_bounds = array<i64: 1, 128>}, {pipeline_mode = #tpu.pipeline_mode<synchronous>, transform_indices = @transform_11, window_bounds = array<i64: 24, 128>}]} {
    %c0_i32 = arith.constant 0 : i32
    %0 = arith.cmpi eq, %arg0, %c0_i32 : i32
    %1 = arith.extui %0 : i1 to i32
    %c0_i32_0 = arith.constant 0 : i32
    %2 = arith.cmpi ne, %1, %c0_i32_0 : i32
    scf.if %2 {
      %cst_29 = arith.constant 0.000000e+00 : f32
      %48 = vector.broadcast %cst_29 : f32 to vector<24x128xf32>
      %c0_30 = arith.constant 0 : index
      %c0_31 = arith.constant 0 : index
      %49 = vector.load %arg15[%c0_30, %c0_31] : memref<24x128xf32, #tpu.memory_space<vmem>>, vector<24x128xf32>
      tpu.vector_store %arg15[%c0_30, %c0_31], %48 {strides = array<i32>} : memref<24x128xf32, #tpu.memory_space<vmem>>, vector<24x128xf32>,
    } else {
    }
    %c0 = arith.constant 0 : index
    %c0_1 = arith.constant 0 : index
    %c0_2 = arith.constant 0 : index
    %3 = vector.load %arg3[%c0, %c0_1, %c0_2] : memref<1x256x128xbf16, #tpu.memory_space<vmem>>, vector<1x256x128xbf16>
    %4 = vector.shape_cast %3 : vector<1x256x128xbf16> to vector<256x128xbf16>
    %c0_3 = arith.constant 0 : index
    %c0_4 = arith.constant 0 : index
    %c0_5 = arith.constant 0 : index
    %5 = vector.load %arg6[%c0_3, %c0_4, %c0_5] : memref<1x128x128xbf16, #tpu.memory_space<vmem>>, vector<1x128x128xbf16>
    %6 = vector.shape_cast %5 : vector<1x128x128xbf16> to vector<128x128xbf16>
    %cst = arith.constant dense<0.000000e+00> : vector<256x128xf32>
    %7 = tpu.matmul %4, %6, %cst {dimension_numbers = #tpu.dot_dimension_numbers<[1], [0], [0], [1], [0, 0, 1, 1], [], []>} : vector<256x128xbf16>, vector<128x128xbf16>, vector<256x128xf32> -> vector<256x128xf32>
    %c0_6 = arith.constant 0 : index
    %c0_7 = arith.constant 0 : index
    %c0_8 = arith.constant 0 : index
    %8 = vector.load %arg7[%c0_6, %c0_7, %c0_8] : memref<1x1x128xf32, #tpu.memory_space<vmem>>, vector<1x1x128xf32>
    %9 = vector.shape_cast %8 : vector<1x1x128xf32> to vector<1x128xf32>
    %10 = vector.broadcast %9 : vector<1x128xf32> to vector<256x128xf32>
    %11 = arith.addf %7, %10 : vector<256x128xf32>
    %cst_9 = arith.constant 0.000000e+00 : f32
    %12 = vector.broadcast %cst_9 : f32 to vector<256x128xf32>
    %13 = arith.maximumf %11, %12 : vector<256x128xf32>
    %14 = arith.truncf %13 : vector<256x128xf32> to vector<256x128xbf16>
    %c0_10 = arith.constant 0 : index
    %c0_11 = arith.constant 0 : index
    %c0_12 = arith.constant 0 : index
    %15 = vector.load %arg8[%c0_10, %c0_11, %c0_12] : memref<1x128x384xbf16, #tpu.memory_space<vmem>>, vector<1x128x384xbf16>
    %16 = vector.shape_cast %15 : vector<1x128x384xbf16> to vector<128x384xbf16>
    %cst_13 = arith.constant dense<0.000000e+00> : vector<256x384xf32>
    %17 = tpu.matmul %14, %16, %cst_13 {dimension_numbers = #tpu.dot_dimension_numbers<[1], [0], [0], [1], [0, 0, 1, 1], [], []>} : vector<256x128xbf16>, vector<128x384xbf16>, vector<256x384xf32> -> vector<256x384xf32>
    %c0_14 = arith.constant 0 : index
    %c0_15 = arith.constant 0 : index
    %c0_16 = arith.constant 0 : index
    %18 = vector.load %arg9[%c0_14, %c0_15, %c0_16] : memref<1x1x384xf32, #tpu.memory_space<vmem>>, vector<1x1x384xf32>
    %19 = vector.shape_cast %18 : vector<1x1x384xf32> to vector<1x384xf32>
    %20 = vector.broadcast %19 : vector<1x384xf32> to vector<256x384xf32>
    %21 = arith.addf %17, %20 : vector<256x384xf32>
    %22 = arith.truncf %21 : vector<256x384xf32> to vector<256x384xbf16>
    %23 = arith.index_cast %arg0 : i32 to index
    %24 = memref.load %arg2[%23] : memref<3xi32, #tpu.memory_space<smem>>
    %c0_17 = arith.constant 0 : index
    %c0_18 = arith.constant 0 : index
    %c0_19 = arith.constant 0 : index
    %25 = vector.load %arg4[%c0_17, %c0_18, %c0_19] : memref<1x3x256xi32, #tpu.memory_space<vmem>>, vector<1x3x256xi32>
    %26 = vector.shape_cast %25 : vector<1x3x256xi32> to vector<3x256xi32>
    %27 = tpu.iota {dimensions = array<i32: 0>} : vector<24x256xi32>
    %28 = vector.extract_strided_slice %26 {offsets = [0, 0], sizes = [1, 256], strides = [1, 1]} : vector<3x256xi32> to vector<1x256xi32>
    %29 = vector.broadcast %28 : vector<1x256xi32> to vector<24x256xi32>
    %30 = arith.cmpi eq, %27, %29 : vector<24x256xi32>
    %31 = arith.extui %30 : vector<24x256xi1> to vector<24x256xi32>
    %32 = arith.sitofp %31 : vector<24x256xi32> to vector<24x256xf32>
    %33 = arith.truncf %32 : vector<24x256xf32> to vector<24x256xbf16>
    %c0_20 = arith.constant 0 : index
    %c0_21 = arith.constant 0 : index
    %34 = vector.load %arg15[%c0_20, %c0_21] : memref<24x128xf32, #tpu.memory_space<vmem>>, vector<24x128xf32>
    %35 = vector.extract_strided_slice %22 {offsets = [0, 0], sizes = [256, 128], strides = [1, 1]} : vector<256x384xbf16> to vector<256x128xbf16>
    %cst_22 = arith.constant dense<0.000000e+00> : vector<24x128xf32>
    %36 = tpu.matmul %33, %35, %cst_22 {dimension_numbers = #tpu.dot_dimension_numbers<[1], [0], [0], [1], [0, 0, 1, 1], [], []>} : vector<24x256xbf16>, vector<256x128xbf16>, vector<24x128xf32> -> vector<24x128xf32>
    %37 = arith.addf %34, %36 : vector<24x128xf32>
    %c0_23 = arith.constant 0 : index
    %c0_24 = arith.constant 0 : index
    %38 = vector.load %arg15[%c0_23, %c0_24] : memref<24x128xf32, #tpu.memory_space<vmem>>, vector<24x128xf32>
    tpu.vector_store %arg15[%c0_23, %c0_24], %37 {strides = array<i32>} : memref<24x128xf32, #tpu.memory_space<vmem>>, vector<24x128xf32>,
    %c1_i32 = arith.constant 1 : i32
    %39 = arith.cmpi sgt, %24, %c1_i32 : i32
    %40 = arith.extui %39 : i1 to i32
    %c0_i32_25 = arith.constant 0 : i32
    %41 = arith.cmpi ne, %40, %c0_i32_25 : i32
    scf.if %41 {
      %48 = vector.extract_strided_slice %26 {offsets = [1, 0], sizes = [1, 256], strides = [1, 1]} : vector<3x256xi32> to vector<1x256xi32>
      %49 = vector.broadcast %48 : vector<1x256xi32> to vector<24x256xi32>
      %50 = arith.cmpi eq, %27, %49 : vector<24x256xi32>
      %51 = arith.extui %50 : vector<24x256xi1> to vector<24x256xi32>
      %52 = arith.sitofp %51 : vector<24x256xi32> to vector<24x256xf32>
      %53 = arith.truncf %52 : vector<24x256xf32> to vector<24x256xbf16>
      %c0_29 = arith.constant 0 : index
      %c0_30 = arith.constant 0 : index
      %54 = vector.load %arg15[%c0_29, %c0_30] : memref<24x128xf32, #tpu.memory_space<vmem>>, vector<24x128xf32>
      %55 = vector.extract_strided_slice %22 {offsets = [0, 128], sizes = [256, 128], strides = [1, 1]} : vector<256x384xbf16> to vector<256x128xbf16>
      %cst_31 = arith.constant dense<0.000000e+00> : vector<24x128xf32>
      %56 = tpu.matmul %53, %55, %cst_31 {dimension_numbers = #tpu.dot_dimension_numbers<[1], [0], [0], [1], [0, 0, 1, 1], [], []>} : vector<24x256xbf16>, vector<256x128xbf16>, vector<24x128xf32> -> vector<24x128xf32>
      %57 = arith.addf %54, %56 : vector<24x128xf32>
      %c0_32 = arith.constant 0 : index
      %c0_33 = arith.constant 0 : index
      %58 = vector.load %arg15[%c0_32, %c0_33] : memref<24x128xf32, #tpu.memory_space<vmem>>, vector<24x128xf32>
      tpu.vector_store %arg15[%c0_32, %c0_33], %57 {strides = array<i32>} : memref<24x128xf32, #tpu.memory_space<vmem>>, vector<24x128xf32>,
    } else {
    }
    %c2_i32 = arith.constant 2 : i32
    %42 = arith.cmpi sgt, %24, %c2_i32 : i32
    %43 = arith.extui %42 : i1 to i32
    %c0_i32_26 = arith.constant 0 : i32
    %44 = arith.cmpi ne, %43, %c0_i32_26 : i32
    scf.if %44 {
      %48 = vector.extract_strided_slice %26 {offsets = [2, 0], sizes = [1, 256], strides = [1, 1]} : vector<3x256xi32> to vector<1x256xi32>
      %49 = vector.broadcast %48 : vector<1x256xi32> to vector<24x256xi32>
      %50 = arith.cmpi eq, %27, %49 : vector<24x256xi32>
      %51 = arith.extui %50 : vector<24x256xi1> to vector<24x256xi32>
      %52 = arith.sitofp %51 : vector<24x256xi32> to vector<24x256xf32>
      %53 = arith.truncf %52 : vector<24x256xf32> to vector<24x256xbf16>
      %c0_29 = arith.constant 0 : index
      %c0_30 = arith.constant 0 : index
      %54 = vector.load %arg15[%c0_29, %c0_30] : memref<24x128xf32, #tpu.memory_space<vmem>>, vector<24x128xf32>
      %55 = vector.extract_strided_slice %22 {offsets = [0, 256], sizes = [256, 128], strides = [1, 1]} : vector<256x384xbf16> to vector<256x128xbf16>
      %cst_31 = arith.constant dense<0.000000e+00> : vector<24x128xf32>
      %56 = tpu.matmul %53, %55, %cst_31 {dimension_numbers = #tpu.dot_dimension_numbers<[1], [0], [0], [1], [0, 0, 1, 1], [], []>} : vector<24x256xbf16>, vector<256x128xbf16>, vector<24x128xf32> -> vector<24x128xf32>
      %57 = arith.addf %54, %56 : vector<24x128xf32>
      %c0_32 = arith.constant 0 : index
      %c0_33 = arith.constant 0 : index
      %58 = vector.load %arg15[%c0_32, %c0_33] : memref<24x128xf32, #tpu.memory_space<vmem>>, vector<24x128xf32>
      tpu.vector_store %arg15[%c0_32, %c0_33], %57 {strides = array<i32>} : memref<24x128xf32, #tpu.memory_space<vmem>>, vector<24x128xf32>,
    } else {
    }
    %c2_i32_27 = arith.constant 2 : i32
    %45 = arith.cmpi eq, %arg0, %c2_i32_27 : i32
    %46 = arith.extui %45 : i1 to i32
    %c0_i32_28 = arith.constant 0 : i32
    %47 = arith.cmpi ne, %46, %c0_i32_28 : i32
    scf.if %47 {
      %c0_29 = arith.constant 0 : index
      %c0_30 = arith.constant 0 : index
      %48 = vector.load %arg10[%c0_29, %c0_30] : memref<256x128xbf16, #tpu.memory_space<vmem>>, vector<256x128xbf16>
      %c0_31 = arith.constant 0 : index
      %c0_32 = arith.constant 0 : index
      %49 = vector.load %arg15[%c0_31, %c0_32] : memref<24x128xf32, #tpu.memory_space<vmem>>, vector<24x128xf32>
      %50 = arith.truncf %49 : vector<24x128xf32> to vector<24x128xbf16>
      %c0_33 = arith.constant 0 : index
      %c0_34 = arith.constant 0 : index
      %51 = vector.load %arg5[%c0_33, %c0_34] : memref<24x128xbf16, #tpu.memory_space<vmem>>, vector<24x128xbf16>
      %52 = vector.extract_strided_slice %48 {offsets = [0, 0], sizes = [128, 128], strides = [1, 1]} : vector<256x128xbf16> to vector<128x128xbf16>
      %cst_35 = arith.constant dense<0.000000e+00> : vector<24x128xf32>
      %53 = tpu.matmul %50, %52, %cst_35 {dimension_numbers = #tpu.dot_dimension_numbers<[1], [0], [0], [1], [0, 0, 1, 1], [], []>} : vector<24x128xbf16>, vector<128x128xbf16>, vector<24x128xf32> -> vector<24x128xf32>
      %54 = vector.extract_strided_slice %48 {offsets = [128, 0], sizes = [128, 128], strides = [1, 1]} : vector<256x128xbf16> to vector<128x128xbf16>
      %cst_36 = arith.constant dense<0.000000e+00> : vector<24x128xf32>
      %55 = tpu.matmul %51, %54, %cst_36 {dimension_numbers = #tpu.dot_dimension_numbers<[1], [0], [0], [1], [0, 0, 1, 1], [], []>} : vector<24x128xbf16>, vector<128x128xbf16>, vector<24x128xf32> -> vector<24x128xf32>
      %56 = arith.addf %53, %55 : vector<24x128xf32>
      %c0_37 = arith.constant 0 : index
      %c0_38 = arith.constant 0 : index
      %57 = vector.load %arg11[%c0_37, %c0_38] : memref<1x128xf32, #tpu.memory_space<vmem>>, vector<1x128xf32>
      %58 = vector.broadcast %57 : vector<1x128xf32> to vector<24x128xf32>
      %59 = arith.addf %56, %58 : vector<24x128xf32>
      %cst_39 = arith.constant 0.000000e+00 : f32
      %60 = vector.broadcast %cst_39 : f32 to vector<24x128xf32>
      %61 = arith.maximumf %59, %60 : vector<24x128xf32>
      %62 = arith.truncf %61 : vector<24x128xf32> to vector<24x128xbf16>
      %c0_40 = arith.constant 0 : index
      %c0_41 = arith.constant 0 : index
      %63 = vector.load %arg12[%c0_40, %c0_41] : memref<128x128xbf16, #tpu.memory_space<vmem>>, vector<128x128xbf16>
      %cst_42 = arith.constant dense<0.000000e+00> : vector<24x128xf32>
      %64 = tpu.matmul %62, %63, %cst_42 {dimension_numbers = #tpu.dot_dimension_numbers<[1], [0], [0], [1], [0, 0, 1, 1], [], []>} : vector<24x128xbf16>, vector<128x128xbf16>, vector<24x128xf32> -> vector<24x128xf32>
      %c0_43 = arith.constant 0 : index
      %c0_44 = arith.constant 0 : index
      %65 = vector.load %arg13[%c0_43, %c0_44] : memref<1x128xf32, #tpu.memory_space<vmem>>, vector<1x128xf32>
      %66 = vector.broadcast %65 : vector<1x128xf32> to vector<24x128xf32>
      %67 = arith.addf %64, %66 : vector<24x128xf32>
      %68 = arith.truncf %67 : vector<24x128xf32> to vector<24x128xbf16>
      %c0_45 = arith.constant 0 : index
      %c0_46 = arith.constant 0 : index
      %69 = vector.load %arg14[%c0_45, %c0_46] : memref<24x128xbf16, #tpu.memory_space<vmem>>, vector<24x128xbf16>
      tpu.vector_store %arg14[%c0_45, %c0_46], %68 {strides = array<i32>} : memref<24x128xbf16, #tpu.memory_space<vmem>>, vector<24x128xbf16>,
    } else {
    }
    return
  }
  func.func @transform_0(%arg0: i32, %arg1: memref<3xi32, #tpu.memory_space<smem>>, %arg2: memref<3xi32, #tpu.memory_space<smem>>) -> (i32, i32, i32) {
    %c0_i32 = arith.constant 0 : i32
    %c0_i32_0 = arith.constant 0 : i32
    %c0_i32_1 = arith.constant 0 : i32
    return %arg0, %c0_i32, %c0_i32_0 : i32, i32, i32
  }
  func.func @transform_1(%arg0: i32, %arg1: memref<3xi32, #tpu.memory_space<smem>>, %arg2: memref<3xi32, #tpu.memory_space<smem>>) -> (i32, i32, i32) {
    %c0_i32 = arith.constant 0 : i32
    %c0_i32_0 = arith.constant 0 : i32
    %c0_i32_1 = arith.constant 0 : i32
    return %arg0, %c0_i32, %c0_i32_0 : i32, i32, i32
  }
  func.func @transform_2(%arg0: i32, %arg1: memref<3xi32, #tpu.memory_space<smem>>, %arg2: memref<3xi32, #tpu.memory_space<smem>>) -> (i32, i32) {
    %c0_i32 = arith.constant 0 : i32
    %c0_i32_0 = arith.constant 0 : i32
    %c0_i32_1 = arith.constant 0 : i32
    return %c0_i32, %c0_i32_0 : i32, i32
  }
  func.func @transform_3(%arg0: i32, %arg1: memref<3xi32, #tpu.memory_space<smem>>, %arg2: memref<3xi32, #tpu.memory_space<smem>>) -> (i32, i32, i32) {
    %0 = arith.index_cast %arg0 : i32 to index
    %1 = memref.load %arg1[%0] : memref<3xi32, #tpu.memory_space<smem>>
    %c0_i32 = arith.constant 0 : i32
    %c0_i32_0 = arith.constant 0 : i32
    %c0_i32_1 = arith.constant 0 : i32
    return %1, %c0_i32, %c0_i32_0 : i32, i32, i32
  }
  func.func @transform_4(%arg0: i32, %arg1: memref<3xi32, #tpu.memory_space<smem>>, %arg2: memref<3xi32, #tpu.memory_space<smem>>) -> (i32, i32, i32) {
    %0 = arith.index_cast %arg0 : i32 to index
    %1 = memref.load %arg1[%0] : memref<3xi32, #tpu.memory_space<smem>>
    %c0_i32 = arith.constant 0 : i32
    %c0_i32_0 = arith.constant 0 : i32
    %c0_i32_1 = arith.constant 0 : i32
    return %1, %c0_i32, %c0_i32_0 : i32, i32, i32
  }
  func.func @transform_5(%arg0: i32, %arg1: memref<3xi32, #tpu.memory_space<smem>>, %arg2: memref<3xi32, #tpu.memory_space<smem>>) -> (i32, i32, i32) {
    %0 = arith.index_cast %arg0 : i32 to index
    %1 = memref.load %arg1[%0] : memref<3xi32, #tpu.memory_space<smem>>
    %c0_i32 = arith.constant 0 : i32
    %c0_i32_0 = arith.constant 0 : i32
    %c0_i32_1 = arith.constant 0 : i32
    return %1, %c0_i32, %c0_i32_0 : i32, i32, i32
  }
  func.func @transform_6(%arg0: i32, %arg1: memref<3xi32, #tpu.memory_space<smem>>, %arg2: memref<3xi32, #tpu.memory_space<smem>>) -> (i32, i32, i32) {
    %0 = arith.index_cast %arg0 : i32 to index
    %1 = memref.load %arg1[%0] : memref<3xi32, #tpu.memory_space<smem>>
    %c0_i32 = arith.constant 0 : i32
    %c0_i32_0 = arith.constant 0 : i32
    %c0_i32_1 = arith.constant 0 : i32
    return %1, %c0_i32, %c0_i32_0 : i32, i32, i32
  }
  func.func @transform_7(%arg0: i32, %arg1: memref<3xi32, #tpu.memory_space<smem>>, %arg2: memref<3xi32, #tpu.memory_space<smem>>) -> (i32, i32) {
    %c0_i32 = arith.constant 0 : i32
    %c0_i32_0 = arith.constant 0 : i32
    %c0_i32_1 = arith.constant 0 : i32
    return %c0_i32, %c0_i32_0 : i32, i32
  }
  func.func @transform_8(%arg0: i32, %arg1: memref<3xi32, #tpu.memory_space<smem>>, %arg2: memref<3xi32, #tpu.memory_space<smem>>) -> (i32, i32) {
    %c0_i32 = arith.constant 0 : i32
    %c0_i32_0 = arith.constant 0 : i32
    %c0_i32_1 = arith.constant 0 : i32
    return %c0_i32, %c0_i32_0 : i32, i32
  }
  func.func @transform_9(%arg0: i32, %arg1: memref<3xi32, #tpu.memory_space<smem>>, %arg2: memref<3xi32, #tpu.memory_space<smem>>) -> (i32, i32) {
    %c0_i32 = arith.constant 0 : i32
    %c0_i32_0 = arith.constant 0 : i32
    %c0_i32_1 = arith.constant 0 : i32
    return %c0_i32, %c0_i32_0 : i32, i32
  }
  func.func @transform_10(%arg0: i32, %arg1: memref<3xi32, #tpu.memory_space<smem>>, %arg2: memref<3xi32, #tpu.memory_space<smem>>) -> (i32, i32) {
    %c0_i32 = arith.constant 0 : i32
    %c0_i32_0 = arith.constant 0 : i32
    %c0_i32_1 = arith.constant 0 : i32
    return %c0_i32, %c0_i32_0 : i32, i32
  }
  func.func @transform_11(%arg0: i32, %arg1: memref<3xi32, #tpu.memory_space<smem>>, %arg2: memref<3xi32, #tpu.memory_space<smem>>) -> (i32, i32) {
    %c0_i32 = arith.constant 0 : i32
    %c0_i32_0 = arith.constant 0 : i32
    %c0_i32_1 = arith.constant 0 : i32
    return %c0_i32, %c0_i32_0 : i32, i32
  }
}

</mosaic_0001>

<llo_original>
// kernel: tpu_custom_call.1
$region0: #{tpu_custom_call.1}
  #allocation0 [shape = 'u32[]', space=smem, size = 0x4, offset = 0x4, fixed_abs, tag = 'smem constant byte address 0x4 - core index']
  #allocation1 [shape = 'u32[72,128]{1,0:T(1,128)}', space=vmem, size = 0x9000, scoped, tag = 'internal scratch']
  #allocation2 [shape = 'f32[24,128]{1,0:T(8,128)}', space=vmem, size = 0x3000, scoped, tag = 'scratch operand']
  #allocation3 [shape = 's32[1]{0}', space=sflag, size = 0x4, scoped, tag = 'scoped memory for tpu_custom_call.1']
  #allocation4 [shape = 'u8[512]{0}', space=smem, size = 0x200, scoped, tag = 'prefetched SMEM operand 0']
  #allocation5 [shape = 'u8[512]{0}', space=smem, size = 0x200, scoped, tag = 'prefetched SMEM operand 1']
  %s0 = inlined_call_operand.hbm [shape: s32[3], index: 0, kind: input, shape index: {}]
  %s1 = inlined_call_operand.hbm [shape: s32[3], index: 1, kind: input, shape index: {}]
  %s2 = inlined_call_operand.hbm [shape: bf16[3,256,128], index: 2, kind: input, shape index: {}]
  %s3 = inlined_call_operand.hbm [shape: s32[3,3,256], index: 3, kind: input, shape index: {}]
  %s4 = inlined_call_operand.hbm [shape: bf16[24,128], index: 4, kind: input, shape index: {}]
  %s5 = inlined_call_operand.hbm [shape: bf16[3,128,128], index: 5, kind: input, shape index: {}]
  %s6 = inlined_call_operand.vmem [shape: f32[3,1,128], index: 6, kind: input, shape index: {}]
  %s7 = inlined_call_operand.hbm [shape: bf16[3,128,384], index: 7, kind: input, shape index: {}]
  %s8 = inlined_call_operand.hbm [shape: f32[3,1,384], index: 8, kind: input, shape index: {}]
  %s9 = inlined_call_operand.hbm [shape: bf16[256,128], index: 9, kind: input, shape index: {}]
  %s10 = inlined_call_operand.vmem [shape: f32[1,128], index: 10, kind: input, shape index: {}]
  %s11 = inlined_call_operand.hbm [shape: bf16[128,128], index: 11, kind: input, shape index: {}]
  %s12 = inlined_call_operand.vmem [shape: f32[1,128], index: 12, kind: input, shape index: {}]
  %s13 = inlined_call_operand.hbm [shape: bf16[24,128], index: 13, kind: output, shape index: {}]
  %s14 = sld [smem:[#allocation0]]
  $region125: #{tpu_custom_call.1} parent=0
    _
  %s16 = ssub.s32 1, %s14
  %s17 = scalar_select 0, %s16, %s14
  %s19 = sshll.u32 %s0, 4
  %s20 = int_to_ptr.hbm [resolvable:$true] %s19
  %22 = dma.hbm_to_smem %s20, 16, [#allocation4], [#allocation3]
  %s24 = sshll.u32 %s1, 4
  %s25 = int_to_ptr.hbm [resolvable:$true] %s24
  %27 = dma.hbm_to_smem %s25, 16, [#allocation5], [#allocation3]
  %29 = dma.done [#allocation3], 32
  %30 = sfence
  $region1: #{tpu_custom_call.1} parent=0
    #allocation6 [shape = 'u8[131072]{0}', space=vmem, size = 0x20000, scoped, tag = 'input window, operand 2']
    #allocation7 [shape = 's32[2]{0}', space=sflag, size = 0x8, scoped, tag = 'scoped memory for tpu_custom_call.1']
    #allocation8 [shape = 's32[2]{0}', space=sflag, size = 0x8, scoped, tag = 'scoped memory for tpu_custom_call.1']
    #allocation9 [shape = 'u8[8192]{0}', space=vmem, size = 0x2000, scoped, tag = 'input window, operand 3']
    #allocation10 [shape = 's32[2]{0}', space=sflag, size = 0x8, scoped, tag = 'scoped memory for tpu_custom_call.1']
    #allocation11 [shape = 'u8[6144]{0}', space=vmem, size = 0x1800, scoped, tag = 'input window, operand 4, single buffered']
    #allocation12 [shape = 'u8[65536]{0}', space=vmem, size = 0x10000, scoped, tag = 'input window, operand 5']
    #allocation13 [shape = 's32[2]{0}', space=sflag, size = 0x8, scoped, tag = 'scoped memory for tpu_custom_call.1']
    #allocation14 [shape = 'u8[196608]{0}', space=vmem, size = 0x30000, scoped, tag = 'input window, operand 7']
    #allocation15 [shape = 'u8[3072]{0}', space=vmem, size = 0xc00, scoped, tag = 'input window, operand 8']
    #allocation16 [shape = 's32[2]{0}', space=sflag, size = 0x8, scoped, tag = 'scoped memory for tpu_custom_call.1']
    #allocation17 [shape = 'u8[65536]{0}', space=vmem, size = 0x10000, scoped, tag = 'input window, operand 9, single buffered']
    #allocation18 [shape = 'u8[32768]{0}', space=vmem, size = 0x8000, scoped, tag = 'input window, operand 11, single buffered']
    #allocation19 [shape = 's32[1]{0}', space=sflag, size = 0x4, scoped, tag = 'scoped memory for tpu_custom_call.1']
    #allocation20 [shape = 'u8[6144]{0}', space=vmem, size = 0x1800, scoped, tag = 'output window, operand 0, single buffered']
    %31 = vsyncpa [#allocation7], 0
    %s32 = scalar_lea.sflag [#allocation7], 1
    %33 = vsyncpa %s32, 0
    %34 = vsyncpa [#allocation10], 0
    %s35 = scalar_lea.sflag [#allocation10], 1
    %36 = vsyncpa %s35, 0
    %37 = vsyncpa [#allocation13], 0
    %s38 = scalar_lea.sflag [#allocation13], 1
    %39 = vsyncpa %s38, 0
    %40 = vsyncpa [#allocation16], 0
    %s41 = scalar_lea.sflag [#allocation16], 1
    %42 = vsyncpa %s41, 0
    %43 = vsyncpa [#allocation19], 0
    %44 = vsyncpa [#allocation8], 0
    loop: start=0, step=1, limit=5
    $region2: #{tpu_custom_call.1} parent=1 // loop_pre_header
      _
    $region3: #{tpu_custom_call.1} parent=1 // loop_header
      %s46 = sphi 0, %s50
      %p47 = scmp.ge.s32.totalorder %s46, 5
      %s56 = sphi 0, %s58
      %s59 = sphi 0, %s56
      %s60 = sphi 0, %s59
      %s76 = sphi 0, %s60
      %s82 = sphi 0, %s84
      %s85 = sphi 0, %s82
      %s86 = sphi 0, %s85
      %s102 = sphi 0, %s86
      %s106 = sphi 0, %s106
      %s108 = sphi 0, %s106
      %s109 = sphi 0, %s108
      %s123 = sphi 0, %s109
      %s131 = sphi 0, %s133
      %s134 = sphi 0, %s131
      %s135 = sphi 0, %s134
      %s151 = sphi 0, %s135
      %s159 = sphi 0, %s161
      %s162 = sphi 0, %s159
      %s163 = sphi 0, %s162
      %s179 = sphi 0, %s163
      %s187 = sphi 0, %s189
      %s190 = sphi 0, %s187
      %s191 = sphi 0, %s190
      %s207 = sphi 0, %s191
      %s215 = sphi 0, %s217
      %s218 = sphi 0, %s215
      %s219 = sphi 0, %s218
      %s235 = sphi 0, %s219
      %s239 = sphi 0, %s239
      %s241 = sphi 0, %s239
      %s242 = sphi 0, %s241
      %s256 = sphi 0, %s242
      %s260 = sphi 0, %s260
      %s262 = sphi 0, %s260
      %s263 = sphi 0, %s262
      %s277 = sphi 0, %s263
      %s281 = sphi 0, %s281
      %s283 = sphi 0, %s281
      %s284 = sphi 0, %s283
      %s298 = sphi 0, %s284
      %s302 = sphi 0, %s302
      %s304 = sphi 0, %s302
      %s305 = sphi 0, %s304
      %s319 = sphi 0, %s305
      %s323 = sphi 0, %s323
      %s325 = sphi 0, %s323
      %s326 = sphi 0, %s325
      %s340 = sphi 0, %s326
    $region4: #{tpu_custom_call.1} parent=1 // loop_header_branch
      %49 = sbr.rel (%p47) target = $region8
    $region5: #{tpu_custom_call.1} parent=1 // loop_body
      %s51 = ssub.s32 %s46, 1
      %s52 = ssub.s32 %s46, 2
      %s53 = sadd.s32 %s46, 1
      %s54 = ssub.s32 %s46, %s53
      %p55 = scmp.eq.s32.totalorder %s54, 0
      %s57 = sadd.s32 %s56, 1
      %s58 = scalar_select %p55, %s56, %s57
      %p61 = pneg %p55
      %p62 = scmp.eq.s32.totalorder %s46, 2
      %p63 = por %p61, %p62
      %p64 = scmp.ne.s32.totalorder %s56, %s59
      %p65 = scmp.eq.s32.totalorder %s46, 0
      %p66 = por %p64, %p65
      %p67 = scmp.ne.s32.totalorder %s56, %s59
      %p68 = scmp.eq.s32.totalorder %s51, 2
      %p69 = por %p67, %p68
      %p70 = scmp.ne.s32.totalorder %s59, %s60
      %p71 = scmp.eq.s32.totalorder %s51, 0
      %p72 = por %p70, %p71
      %p73 = scmp.ne.s32.totalorder %s59, %s60
      %p74 = scmp.eq.s32.totalorder %s52, 2
      %p75 = por %p73, %p74
      %p77 = scmp.ne.s32.totalorder %s60, %s76
      %p78 = scmp.eq.s32.totalorder %s52, 0
      %p79 = por %p77, %p78
      %s80 = ssub.s32 %s46, %s53
      %p81 = scmp.eq.s32.totalorder %s80, 0
      %s83 = sadd.s32 %s82, 1
      %s84 = scalar_select %p81, %s82, %s83
      %p87 = pneg %p81
      %p88 = scmp.eq.s32.totalorder %s46, 2
      %p89 = por %p87, %p88
      %p90 = scmp.ne.s32.totalorder %s82, %s85
      %p91 = scmp.eq.s32.totalorder %s46, 0
      %p92 = por %p90, %p91
      %p93 = scmp.ne.s32.totalorder %s82, %s85
      %p94 = scmp.eq.s32.totalorder %s51, 2
      %p95 = por %p93, %p94
      %p96 = scmp.ne.s32.totalorder %s85, %s86
      %p97 = scmp.eq.s32.totalorder %s51, 0
      %p98 = por %p96, %p97
      %p99 = scmp.ne.s32.totalorder %s85, %s86
      %p100 = scmp.eq.s32.totalorder %s52, 2
      %p101 = por %p99, %p100
      %p103 = scmp.ne.s32.totalorder %s86, %s102
      %p104 = scmp.eq.s32.totalorder %s52, 0
      %p105 = por %p103, %p104
      %s107 = sadd.s32 %s106, 1
      %p110 = scmp.eq.s32.totalorder %s46, 2
      %p111 = scmp.ne.s32.totalorder %s106, %s108
      %p112 = scmp.eq.s32.totalorder %s46, 0
      %p113 = por %p111, %p112
      %p114 = scmp.ne.s32.totalorder %s106, %s108
      %p115 = scmp.eq.s32.totalorder %s51, 2
      %p116 = por %p114, %p115
      %p117 = scmp.ne.s32.totalorder %s108, %s109
      %p118 = scmp.eq.s32.totalorder %s51, 0
      %p119 = por %p117, %p118
      %p120 = scmp.ne.s32.totalorder %s108, %s109
      %p121 = scmp.eq.s32.totalorder %s52, 2
      %p122 = por %p120, %p121
      %p124 = scmp.ne.s32.totalorder %s109, %s123
      %p125 = scmp.eq.s32.totalorder %s52, 0
      %p126 = por %p124, %p125
      %s127 = sld [smem:[#allocation4 + %s46]]
      %s128 = sld [smem:[#allocation4 + %s53]]
      %s129 = ssub.s32 %s127, %s128
      %p130 = scmp.eq.s32.totalorder %s129, 0
      %s132 = sadd.s32 %s131, 1
      %s133 = scalar_select %p130, %s131, %s132
      %p136 = pneg %p130
      %p137 = scmp.eq.s32.totalorder %s46, 2
      %p138 = por %p136, %p137
      %p139 = scmp.ne.s32.totalorder %s131, %s134
      %p140 = scmp.eq.s32.totalorder %s46, 0
      %p141 = por %p139, %p140
      %p142 = scmp.ne.s32.totalorder %s131, %s134
      %p143 = scmp.eq.s32.totalorder %s51, 2
      %p144 = por %p142, %p143
      %p145 = scmp.ne.s32.totalorder %s134, %s135
      %p146 = scmp.eq.s32.totalorder %s51, 0
      %p147 = por %p145, %p146
      %p148 = scmp.ne.s32.totalorder %s134, %s135
      %p149 = scmp.eq.s32.totalorder %s52, 2
      %p150 = por %p148, %p149
      %p152 = scmp.ne.s32.totalorder %s135, %s151
      %p153 = scmp.eq.s32.totalorder %s52, 0
      %p154 = por %p152, %p153
      %s155 = sld [smem:[#allocation4 + %s46]]
      %s156 = sld [smem:[#allocation4 + %s53]]
      %s157 = ssub.s32 %s155, %s156
      %p158 = scmp.eq.s32.totalorder %s157, 0
      %s160 = sadd.s32 %s159, 1
      %s161 = scalar_select %p158, %s159, %s160
      %p164 = pneg %p158
      %p165 = scmp.eq.s32.totalorder %s46, 2
      %p166 = por %p164, %p165
      %p167 = scmp.ne.s32.totalorder %s159, %s162
      %p168 = scmp.eq.s32.totalorder %s46, 0
      %p169 = por %p167, %p168
      %p170 = scmp.ne.s32.totalorder %s159, %s162
      %p171 = scmp.eq.s32.totalorder %s51, 2
      %p172 = por %p170, %p171
      %p173 = scmp.ne.s32.totalorder %s162, %s163
      %p174 = scmp.eq.s32.totalorder %s51, 0
      %p175 = por %p173, %p174
      %p176 = scmp.ne.s32.totalorder %s162, %s163
      %p177 = scmp.eq.s32.totalorder %s52, 2
      %p178 = por %p176, %p177
      %p180 = scmp.ne.s32.totalorder %s163, %s179
      %p181 = scmp.eq.s32.totalorder %s52, 0
      %p182 = por %p180, %p181
      %s183 = sld [smem:[#allocation4 + %s46]]
      %s184 = sld [smem:[#allocation4 + %s53]]
      %s185 = ssub.s32 %s183, %s184
      %p186 = scmp.eq.s32.totalorder %s185, 0
      %s188 = sadd.s32 %s187, 1
      %s189 = scalar_select %p186, %s187, %s188
      %p192 = pneg %p186
      %p193 = scmp.eq.s32.totalorder %s46, 2
      %p194 = por %p192, %p193
      %p195 = scmp.ne.s32.totalorder %s187, %s190
      %p196 = scmp.eq.s32.totalorder %s46, 0
      %p197 = por %p195, %p196
      %p198 = scmp.ne.s32.totalorder %s187, %s190
      %p199 = scmp.eq.s32.totalorder %s51, 2
      %p200 = por %p198, %p199
      %p201 = scmp.ne.s32.totalorder %s190, %s191
      %p202 = scmp.eq.s32.totalorder %s51, 0
      %p203 = por %p201, %p202
      %p204 = scmp.ne.s32.totalorder %s190, %s191
      %p205 = scmp.eq.s32.totalorder %s52, 2
      %p206 = por %p204, %p205
      %p208 = scmp.ne.s32.totalorder %s191, %s207
      %p209 = scmp.eq.s32.totalorder %s52, 0
      %p210 = por %p208, %p209
      %s211 = sld [smem:[#allocation4 + %s46]]
      %s212 = sld [smem:[#allocation4 + %s53]]
      %s213 = ssub.s32 %s211, %s212
      %p214 = scmp.eq.s32.totalorder %s213, 0
      %s216 = sadd.s32 %s215, 1
      %s217 = scalar_select %p214, %s215, %s216
      %p220 = pneg %p214
      %p221 = scmp.eq.s32.totalorder %s46, 2
      %p222 = por %p220, %p221
      %p223 = scmp.ne.s32.totalorder %s215, %s218
      %p224 = scmp.eq.s32.totalorder %s46, 0
      %p225 = por %p223, %p224
      %p226 = scmp.ne.s32.totalorder %s215, %s218
      %p227 = scmp.eq.s32.totalorder %s51, 2
      %p228 = por %p226, %p227
      %p229 = scmp.ne.s32.totalorder %s218, %s219
      %p230 = scmp.eq.s32.totalorder %s51, 0
      %p231 = por %p229, %p230
      %p232 = scmp.ne.s32.totalorder %s218, %s219
      %p233 = scmp.eq.s32.totalorder %s52, 2
      %p234 = por %p232, %p233
      %p236 = scmp.ne.s32.totalorder %s219, %s235
      %p237 = scmp.eq.s32.totalorder %s52, 0
      %p238 = por %p236, %p237
      %s240 = sadd.s32 %s239, 1
      %p243 = scmp.eq.s32.totalorder %s46, 2
      %p244 = scmp.ne.s32.totalorder %s239, %s241
      %p245 = scmp.eq.s32.totalorder %s46, 0
      %p246 = por %p244, %p245
      %p247 = scmp.ne.s32.totalorder %s239, %s241
      %p248 = scmp.eq.s32.totalorder %s51, 2
      %p249 = por %p247, %p248
      %p250 = scmp.ne.s32.totalorder %s241, %s242
      %p251 = scmp.eq.s32.totalorder %s51, 0
      %p252 = por %p250, %p251
      %p253 = scmp.ne.s32.totalorder %s241, %s242
      %p254 = scmp.eq.s32.totalorder %s52, 2
      %p255 = por %p253, %p254
      %p257 = scmp.ne.s32.totalorder %s242, %s256
      %p258 = scmp.eq.s32.totalorder %s52, 0
      %p259 = por %p257, %p258
      %s261 = sadd.s32 %s260, 1
      %p264 = scmp.eq.s32.totalorder %s46, 2
      %p265 = scmp.ne.s32.totalorder %s260, %s262
      %p266 = scmp.eq.s32.totalorder %s46, 0
      %p267 = por %p265, %p266
      %p268 = scmp.ne.s32.totalorder %s260, %s262
      %p269 = scmp.eq.s32.totalorder %s51, 2
      %p270 = por %p268, %p269
      %p271 = scmp.ne.s32.totalorder %s262, %s263
      %p272 = scmp.eq.s32.totalorder %s51, 0
      %p273 = por %p271, %p272
      %p274 = scmp.ne.s32.totalorder %s262, %s263
      %p275 = scmp.eq.s32.totalorder %s52, 2
      %p276 = por %p274, %p275
      %p278 = scmp.ne.s32.totalorder %s263, %s277
      %p279 = scmp.eq.s32.totalorder %s52, 0
      %p280 = por %p278, %p279
      %s282 = sadd.s32 %s281, 1
      %p285 = scmp.eq.s32.totalorder %s46, 2
      %p286 = scmp.ne.s32.totalorder %s281, %s283
      %p287 = scmp.eq.s32.totalorder %s46, 0
      %p288 = por %p286, %p287
      %p289 = scmp.ne.s32.totalorder %s281, %s283
      %p290 = scmp.eq.s32.totalorder %s51, 2
      %p291 = por %p289, %p290
      %p292 = scmp.ne.s32.totalorder %s283, %s284
      %p293 = scmp.eq.s32.totalorder %s51, 0
      %p294 = por %p292, %p293
      %p295 = scmp.ne.s32.totalorder %s283, %s284
      %p296 = scmp.eq.s32.totalorder %s52, 2
      %p297 = por %p295, %p296
      %p299 = scmp.ne.s32.totalorder %s284, %s298
      %p300 = scmp.eq.s32.totalorder %s52, 0
      %p301 = por %p299, %p300
      %s303 = sadd.s32 %s302, 1
      %p306 = scmp.eq.s32.totalorder %s46, 2
      %p307 = scmp.ne.s32.totalorder %s302, %s304
      %p308 = scmp.eq.s32.totalorder %s46, 0
      %p309 = por %p307, %p308
      %p310 = scmp.ne.s32.totalorder %s302, %s304
      %p311 = scmp.eq.s32.totalorder %s51, 2
      %p312 = por %p310, %p311
      %p313 = scmp.ne.s32.totalorder %s304, %s305
      %p314 = scmp.eq.s32.totalorder %s51, 0
      %p315 = por %p313, %p314
      %p316 = scmp.ne.s32.totalorder %s304, %s305
      %p317 = scmp.eq.s32.totalorder %s52, 2
      %p318 = por %p316, %p317
      %p320 = scmp.ne.s32.totalorder %s305, %s319
      %p321 = scmp.eq.s32.totalorder %s52, 0
      %p322 = por %p320, %p321
      %s324 = sadd.s32 %s323, 1
      %p327 = scmp.eq.s32.totalorder %s46, 2
      %p328 = scmp.ne.s32.totalorder %s323, %s325
      %p329 = scmp.eq.s32.totalorder %s46, 0
      %p330 = por %p328, %p329
      %p331 = scmp.ne.s32.totalorder %s323, %s325
      %p332 = scmp.eq.s32.totalorder %s51, 2
      %p333 = por %p331, %p332
      %p334 = scmp.ne.s32.totalorder %s325, %s326
      %p335 = scmp.eq.s32.totalorder %s51, 0
      %p336 = por %p334, %p335
      %p337 = scmp.ne.s32.totalorder %s325, %s326
      %p338 = scmp.eq.s32.totalorder %s52, 2
      %p339 = por %p337, %p338
      %p341 = scmp.ne.s32.totalorder %s326, %s340
      %p342 = scmp.eq.s32.totalorder %s52, 0
      %p343 = por %p341, %p342
      %p344 = scmp.le.s32.totalorder 1, %s46
      %p345 = scmp.lt.s32.totalorder %s46, 4
      %p346 = pnand %p344, %p345
      %p347 = pneg %p346
      // Predicated region
      $region9: #{tpu_custom_call.1} parent=5 // pred_check
        _
      $region10: #{tpu_custom_call.1} parent=5 // pred_check_branch
        %349 = sbr.rel (%p346) target = $region12
      $region11: #{tpu_custom_call.1} parent=5 // pred_region
        %s350 = ssub.s32 %s46, 1
        // Predicated region
        $region13: #{tpu_custom_call.1} parent=11 // pred_check
          %p351 = pneg %p119
        $region14: #{tpu_custom_call.1} parent=11 // pred_check_branch
          %353 = sbr.rel (%p351) target = $region16
        $region15: #{tpu_custom_call.1} parent=11 // pred_region
          %355 = vsyncadd [#allocation10], 0
          %s356 = sshll.u32 %s4, 4
          %s357 = int_to_ptr.hbm [resolvable:$true] %s356
          %s358 = sshll.u32 [#allocation11], 4
          %s359 = int_to_ptr.vmem [resolvable:$true] %s358
          %364 = dma.hbm_to_vmem [thread:$0]  %s357, 192, %s359, [#allocation10], 64, 64, 4
        $region16: #{tpu_custom_call.1} parent=11 // pred_fallthru
          _
        // Predicated region
        $region17: #{tpu_custom_call.1} parent=11 // pred_check
          %p365 = pneg %p252
        $region18: #{tpu_custom_call.1} parent=11 // pred_check_branch
          %367 = sbr.rel (%p365) target = $region20
        $region19: #{tpu_custom_call.1} parent=11 // pred_region
          %369 = vsyncadd [#allocation16], 0
          %s370 = sshll.u32 %s9, 4
          %s371 = int_to_ptr.hbm [resolvable:$true] %s370
          %s372 = sshll.u32 [#allocation17], 4
          %s373 = int_to_ptr.vmem [resolvable:$true] %s372
          %378 = dma.hbm_to_vmem [thread:$0]  %s371, 2048, %s373, [#allocation16], 64, 64, 4
        $region20: #{tpu_custom_call.1} parent=11 // pred_fallthru
          _
        // Predicated region
        $region21: #{tpu_custom_call.1} parent=11 // pred_check
          %p379 = pneg %p273
        $region22: #{tpu_custom_call.1} parent=11 // pred_check_branch
          %381 = sbr.rel (%p379) target = $region24
        $region23: #{tpu_custom_call.1} parent=11 // pred_region
          _
        $region24: #{tpu_custom_call.1} parent=11 // pred_fallthru
          _
        // Predicated region
        $region25: #{tpu_custom_call.1} parent=11 // pred_check
          %p382 = pneg %p294
        $region26: #{tpu_custom_call.1} parent=11 // pred_check_branch
          %384 = sbr.rel (%p382) target = $region28
        $region27: #{tpu_custom_call.1} parent=11 // pred_region
          %386 = vsyncadd [#allocation19], 0
          %s387 = sshll.u32 %s11, 4
          %s388 = int_to_ptr.hbm [resolvable:$true] %s387
          %s389 = sshll.u32 [#allocation18], 4
          %s390 = int_to_ptr.vmem [resolvable:$true] %s389
          %395 = dma.hbm_to_vmem [thread:$0]  %s388, 1024, %s390, [#allocation19], 64, 64, 4
        $region28: #{tpu_custom_call.1} parent=11 // pred_fallthru
          _
        // Predicated region
        $region29: #{tpu_custom_call.1} parent=11 // pred_check
          %p396 = pneg %p315
        $region30: #{tpu_custom_call.1} parent=11 // pred_check_branch
          %398 = sbr.rel (%p396) target = $region32
        $region31: #{tpu_custom_call.1} parent=11 // pred_region
          _
        $region32: #{tpu_custom_call.1} parent=11 // pred_fallthru
          _
      $region12: #{tpu_custom_call.1} parent=5 // pred_fallthru
        _
      %p399 = scmp.lt.s32.totalorder %s46, 3
      // Predicated region
      $region33: #{tpu_custom_call.1} parent=5 // pred_check
        %p400 = pneg %p399
      $region34: #{tpu_custom_call.1} parent=5 // pred_check_branch
        %402 = sbr.rel (%p400) target = $region36
      $region35: #{tpu_custom_call.1} parent=5 // pred_region
        // Predicated region
        $region37: #{tpu_custom_call.1} parent=35 // pred_check
          %p403 = pneg %p66
        $region38: #{tpu_custom_call.1} parent=35 // pred_check_branch
          %405 = sbr.rel (%p403) target = $region40
        $region39: #{tpu_custom_call.1} parent=35 // pred_region
          %s406 = sand.u32 %s56, 1
          %s407 = scalar_lea.sflag [#allocation7], %s406
          %s408 = sand.u32 %s56, 1
          %s409 = smul.addr %s408, 128
          %s410 = scalar_lea.vmem [#allocation6], %s409
          %412 = vsyncadd %s407, 0
          %s413 = smul.addr %s46, 32
          %s414 = smul.addr %s413, 4
          %s415 = scalar_lea.hbm %s2, %s414
          %s416 = sshll.u32 %s415, 4
          %s417 = int_to_ptr.hbm [resolvable:$true] %s416
          %s418 = sshll.u32 %s410, 4
          %s419 = int_to_ptr.vmem [resolvable:$true] %s418
          %424 = dma.hbm_to_vmem [thread:$0]  %s417, 2048, %s419, %s407, 64, 64, 4
        $region40: #{tpu_custom_call.1} parent=35 // pred_fallthru
          _
        // Predicated region
        $region41: #{tpu_custom_call.1} parent=35 // pred_check
          %p425 = pneg %p92
        $region42: #{tpu_custom_call.1} parent=35 // pred_check_branch
          %427 = sbr.rel (%p425) target = $region44
        $region43: #{tpu_custom_call.1} parent=35 // pred_region
          %s428 = sand.u32 %s46, 1
          %s429 = scalar_lea.sflag [#allocation10], %s428
          %s430 = sand.u32 %s82, 1
          %s431 = smul.addr %s430, 8
          %s432 = scalar_lea.vmem [#allocation9], %s431
          %434 = vsyncadd %s429, 0
          %s435 = smul.addr %s46, 2
          %s436 = smul.addr %s435, 4
          %s437 = scalar_lea.hbm %s3, %s436
          %s439 = sshll.u32 %s437, 4
          %s440 = int_to_ptr.hbm [resolvable:$true] %s439
          %s441 = sshll.u32 %s432, 4
          %s442 = int_to_ptr.vmem [resolvable:$true] %s441
          %444 = dma.hbm_to_vmem [thread:$0]  %s440, 128, %s442, %s429
        $region44: #{tpu_custom_call.1} parent=35 // pred_fallthru
          _
        // Predicated region
        $region45: #{tpu_custom_call.1} parent=35 // pred_check
          %p445 = pneg %p141
        $region46: #{tpu_custom_call.1} parent=35 // pred_check_branch
          %447 = sbr.rel (%p445) target = $region48
        $region47: #{tpu_custom_call.1} parent=35 // pred_region
          %s448 = sand.u32 %s46, 1
          %s449 = scalar_lea.sflag [#allocation13], %s448
          %s450 = sand.u32 %s131, 1
          %s451 = smul.addr %s450, 64
          %s452 = scalar_lea.vmem [#allocation12], %s451
          %s453 = sld [smem:[#allocation4 + %s46]]
          %455 = vsyncadd %s449, 0
          %s456 = smul.addr %s453, 16
          %s457 = smul.addr %s456, 4
          %s458 = scalar_lea.hbm %s5, %s457
          %s459 = sshll.u32 %s458, 4
          %s460 = int_to_ptr.hbm [resolvable:$true] %s459
          %s461 = sshll.u32 %s452, 4
          %s462 = int_to_ptr.vmem [resolvable:$true] %s461
          %467 = dma.hbm_to_vmem [thread:$0]  %s460, 1024, %s462, %s449, 64, 64, 4
        $region48: #{tpu_custom_call.1} parent=35 // pred_fallthru
          _
        // Predicated region
        $region49: #{tpu_custom_call.1} parent=35 // pred_check
          %p468 = pneg %p169
        $region50: #{tpu_custom_call.1} parent=35 // pred_check_branch
          %470 = sbr.rel (%p468) target = $region52
        $region51: #{tpu_custom_call.1} parent=35 // pred_region
          %s471 = sld [smem:[#allocation4 + %s46]]
          %p472 = scmp.lt.s32.totalorder %s471, 2
          %s473 = scalar_select %p472, %s471, 2
          %s474 = scalar_lea.vmem %s6, %s473
          %s475 = sld [smem:[#allocation4 + %s46]]
        $region52: #{tpu_custom_call.1} parent=35 // pred_fallthru
          _
        // Predicated region
        $region53: #{tpu_custom_call.1} parent=35 // pred_check
          %p476 = pneg %p197
        $region54: #{tpu_custom_call.1} parent=35 // pred_check_branch
          %478 = sbr.rel (%p476) target = $region56
        $region55: #{tpu_custom_call.1} parent=35 // pred_region
          %s479 = sand.u32 %s46, 1
          %s480 = scalar_lea.sflag [#allocation13], %s479
          %s481 = sand.u32 %s187, 1
          %s482 = smul.addr %s481, 192
          %s483 = scalar_lea.vmem [#allocation14], %s482
          %s484 = sld [smem:[#allocation4 + %s46]]
          %486 = vsyncadd %s480, 0
          %s487 = smul.addr %s484, 48
          %s488 = smul.addr %s487, 4
          %s489 = scalar_lea.hbm %s7, %s488
          %s490 = sshll.u32 %s489, 4
          %s491 = int_to_ptr.hbm [resolvable:$true] %s490
          %s492 = sshll.u32 %s483, 4
          %s493 = int_to_ptr.vmem [resolvable:$true] %s492
          %498 = dma.hbm_to_vmem [thread:$0]  %s491, 3072, %s493, %s480, 192, 192, 12
        $region56: #{tpu_custom_call.1} parent=35 // pred_fallthru
          _
        // Predicated region
        $region57: #{tpu_custom_call.1} parent=35 // pred_check
          %p499 = pneg %p225
        $region58: #{tpu_custom_call.1} parent=35 // pred_check_branch
          %501 = sbr.rel (%p499) target = $region60
        $region59: #{tpu_custom_call.1} parent=35 // pred_region
          %s502 = sand.u32 %s46, 1
          %s503 = scalar_lea.sflag [#allocation16], %s502
          %s504 = sand.u32 %s215, 1
          %s505 = smul.addr %s504, 3
          %s506 = scalar_lea.vmem [#allocation15], %s505
          %s507 = sld [smem:[#allocation4 + %s46]]
          %509 = vsyncadd %s503, 0
          %s510 = smul.addr %s507, 3
          %s511 = scalar_lea.hbm %s8, %s510
          %s513 = sshll.u32 %s511, 4
          %s514 = int_to_ptr.hbm [resolvable:$true] %s513
          %s515 = sshll.u32 %s506, 4
          %s516 = int_to_ptr.vmem [resolvable:$true] %s515
          %518 = dma.hbm_to_vmem [thread:$0]  %s514, 48, %s516, %s503
        $region60: #{tpu_custom_call.1} parent=35 // pred_fallthru
          _
      $region36: #{tpu_custom_call.1} parent=5 // pred_fallthru
        _
      %p519 = scmp.le.s32.totalorder 1, %s46
      %p520 = scmp.lt.s32.totalorder %s46, 4
      %p521 = pnand %p519, %p520
      %p522 = pneg %p521
      // Predicated region
      $region61: #{tpu_custom_call.1} parent=5 // pred_check
        _
      $region62: #{tpu_custom_call.1} parent=5 // pred_check_branch
        %524 = sbr.rel (%p521) target = $region64
      $region63: #{tpu_custom_call.1} parent=5 // pred_region
        %s525 = ssub.s32 %s46, 1
        %s526 = sand.u32 %s59, 1
        %s527 = scalar_lea.sflag [#allocation7], %s526
        %s528 = sand.u32 %s59, 1
        %s529 = smul.addr %s528, 128
        %s530 = scalar_lea.vmem [#allocation6], %s529
        // Predicated region
        $region65: #{tpu_custom_call.1} parent=63 // pred_check
          %p531 = pneg %p72
        $region66: #{tpu_custom_call.1} parent=63 // pred_check_branch
          %533 = sbr.rel (%p531) target = $region68
        $region67: #{tpu_custom_call.1} parent=63 // pred_region
          %535 = dma.done %s527, 2048
        $region68: #{tpu_custom_call.1} parent=63 // pred_fallthru
          _
        %s536 = sand.u32 %s51, 1
        %s537 = scalar_lea.sflag [#allocation10], %s536
        %s538 = sand.u32 %s85, 1
        %s539 = smul.addr %s538, 8
        %s540 = scalar_lea.vmem [#allocation9], %s539
        // Predicated region
        $region69: #{tpu_custom_call.1} parent=63 // pred_check
          %p541 = pneg %p98
        $region70: #{tpu_custom_call.1} parent=63 // pred_check_branch
          %543 = sbr.rel (%p541) target = $region72
        $region71: #{tpu_custom_call.1} parent=63 // pred_region
          %545 = dma.done %s537, 128
        $region72: #{tpu_custom_call.1} parent=63 // pred_fallthru
          _
        // Predicated region
        $region73: #{tpu_custom_call.1} parent=63 // pred_check
          %p546 = pneg %p119
        $region74: #{tpu_custom_call.1} parent=63 // pred_check_branch
          %548 = sbr.rel (%p546) target = $region76
        $region75: #{tpu_custom_call.1} parent=63 // pred_region
          %550 = dma.done [#allocation10], 192
        $region76: #{tpu_custom_call.1} parent=63 // pred_fallthru
          _
        %s551 = sand.u32 %s51, 1
        %s552 = scalar_lea.sflag [#allocation13], %s551
        %s553 = sand.u32 %s134, 1
        %s554 = smul.addr %s553, 64
        %s555 = scalar_lea.vmem [#allocation12], %s554
        // Predicated region
        $region77: #{tpu_custom_call.1} parent=63 // pred_check
          %p556 = pneg %p147
        $region78: #{tpu_custom_call.1} parent=63 // pred_check_branch
          %558 = sbr.rel (%p556) target = $region80
        $region79: #{tpu_custom_call.1} parent=63 // pred_region
          %560 = dma.done %s552, 1024
        $region80: #{tpu_custom_call.1} parent=63 // pred_fallthru
          _
        %s561 = sand.u32 %s51, 1
        %s562 = scalar_lea.sflag [#allocation13], %s561
        %s563 = sand.u32 %s190, 1
        %s564 = smul.addr %s563, 192
        %s565 = scalar_lea.vmem [#allocation14], %s564
        // Predicated region
        $region81: #{tpu_custom_call.1} parent=63 // pred_check
          %p566 = pneg %p203
        $region82: #{tpu_custom_call.1} parent=63 // pred_check_branch
          %568 = sbr.rel (%p566) target = $region84
        $region83: #{tpu_custom_call.1} parent=63 // pred_region
          %570 = dma.done %s562, 3072
        $region84: #{tpu_custom_call.1} parent=63 // pred_fallthru
          _
        %s571 = sand.u32 %s51, 1
        %s572 = scalar_lea.sflag [#allocation16], %s571
        %s573 = sand.u32 %s218, 1
        %s574 = smul.addr %s573, 3
        %s575 = scalar_lea.vmem [#allocation15], %s574
        // Predicated region
        $region85: #{tpu_custom_call.1} parent=63 // pred_check
          %p576 = pneg %p231
        $region86: #{tpu_custom_call.1} parent=63 // pred_check_branch
          %578 = sbr.rel (%p576) target = $region88
        $region87: #{tpu_custom_call.1} parent=63 // pred_region
          %580 = dma.done %s572, 48
        $region88: #{tpu_custom_call.1} parent=63 // pred_fallthru
          _
        // Predicated region
        $region89: #{tpu_custom_call.1} parent=63 // pred_check
          %p581 = pneg %p252
        $region90: #{tpu_custom_call.1} parent=63 // pred_check_branch
          %583 = sbr.rel (%p581) target = $region92
        $region91: #{tpu_custom_call.1} parent=63 // pred_region
          %585 = dma.done [#allocation16], 2048
        $region92: #{tpu_custom_call.1} parent=63 // pred_fallthru
          _
        // Predicated region
        $region93: #{tpu_custom_call.1} parent=63 // pred_check
          %p586 = pneg %p294
        $region94: #{tpu_custom_call.1} parent=63 // pred_check_branch
          %588 = sbr.rel (%p586) target = $region96
        $region95: #{tpu_custom_call.1} parent=63 // pred_region
          %590 = dma.done [#allocation19], 1024
        $region96: #{tpu_custom_call.1} parent=63 // pred_fallthru
          _
        %s591 = sand.u32 %s59, 1
        %s592 = scalar_lea.sflag [#allocation7], %s591
        %s593 = sand.u32 %s59, 1
        %s594 = smul.addr %s593, 128
        %s595 = scalar_lea.vmem [#allocation6], %s594
        %p596 = pneg %p72
        %p597 = pneg %p69
        %s598 = sand.u32 %s51, 1
        %s599 = scalar_lea.sflag [#allocation10], %s598
        %s600 = sand.u32 %s85, 1
        %s601 = smul.addr %s600, 8
        %s602 = scalar_lea.vmem [#allocation9], %s601
        %p603 = pneg %p98
        %p604 = pneg %p95
        %p605 = pneg %p119
        %p606 = pneg %p116
        %s607 = sand.u32 %s51, 1
        %s608 = scalar_lea.sflag [#allocation13], %s607
        %s609 = sand.u32 %s134, 1
        %s610 = smul.addr %s609, 64
        %s611 = scalar_lea.vmem [#allocation12], %s610
        %p612 = pneg %p147
        %p613 = pneg %p144
        %s614 = sld [smem:[#allocation4 + %s51]]
        %p615 = scmp.lt.s32.totalorder %s614, 2
        %s616 = scalar_select %p615, %s614, 2
        %s617 = scalar_lea.vmem %s6, %s616
        %p618 = pneg %p175
        %p619 = pneg %p172
        %s620 = sand.u32 %s51, 1
        %s621 = scalar_lea.sflag [#allocation13], %s620
        %s622 = sand.u32 %s190, 1
        %s623 = smul.addr %s622, 192
        %s624 = scalar_lea.vmem [#allocation14], %s623
        %p625 = pneg %p203
        %p626 = pneg %p200
        %s627 = sand.u32 %s51, 1
        %s628 = scalar_lea.sflag [#allocation16], %s627
        %s629 = sand.u32 %s218, 1
        %s630 = smul.addr %s629, 3
        %s631 = scalar_lea.vmem [#allocation15], %s630
        %p632 = pneg %p231
        %p633 = pneg %p228
        %p634 = pneg %p252
        %p635 = pneg %p249
        %p636 = pneg %p273
        %p637 = pneg %p270
        %p638 = pneg %p294
        %p639 = pneg %p291
        %p640 = pneg %p315
        %p641 = pneg %p312
        %p642 = pneg %p336
        %p643 = pneg %p333
        %s644 = sld [smem:[#allocation4 + %s51]]
        %s645 = sld [smem:[#allocation4 + %s51]]
        %p646 = scmp.lt.s32.totalorder %s645, 2
        %s647 = scalar_select %p646, %s645, 2
        %s648 = scalar_lea.vmem %s6, %s647
        %s649 = sld [smem:[#allocation4 + %s51]]
        %s650 = sld [smem:[#allocation4 + %s51]]
        %s651 = sld [smem:[#allocation4 + %s51]]
        %p652 = scmp.eq.s32.totalorder %s51, 0
        // Predicated region
        $region97: #{tpu_custom_call.1} parent=63 // pred_check
          %p653 = pneg %p652
        $region98: #{tpu_custom_call.1} parent=63 // pred_check_branch
          %655 = sbr.rel (%p653) target = $region100
        $region99: #{tpu_custom_call.1} parent=63 // pred_region
          %656 = vst [vmem:[#allocation2] sm:$0xff] 0.0
          %657 = vst [vmem:[#allocation2 + $0x8] sm:$0xff] 0.0
          %658 = vst [vmem:[#allocation2 + $0x10] sm:$0xff] 0.0
        $region100: #{tpu_custom_call.1} parent=63 // pred_fallthru
          _
        %v659 = vld [vmem:[%s530] sm:$0xf]
        %v660 = vld [vmem:[%s530 + $0x4] sm:$0xf]
        %v661 = vld [vmem:[%s530 + $0x8] sm:$0xf]
        %v662 = vld [vmem:[%s530 + $0xc] sm:$0xf]
        %v663 = vld [vmem:[%s530 + $0x10] sm:$0xf]
        %v664 = vld [vmem:[%s530 + $0x14] sm:$0xf]
        %v665 = vld [vmem:[%s530 + $0x18] sm:$0xf]
        %v666 = vld [vmem:[%s530 + $0x1c] sm:$0xf]
        %v667 = vld [vmem:[%s530 + $0x20] sm:$0xf]
        %v668 = vld [vmem:[%s530 + $0x24] sm:$0xf]
        %v669 = vld [vmem:[%s530 + $0x28] sm:$0xf]
        %v670 = vld [vmem:[%s530 + $0x2c] sm:$0xf]
        %v671 = vld [vmem:[%s530 + $0x30] sm:$0xf]
        %v672 = vld [vmem:[%s530 + $0x34] sm:$0xf]
        %v673 = vld [vmem:[%s530 + $0x38] sm:$0xf]
        %v674 = vld [vmem:[%s530 + $0x3c] sm:$0xf]
        %v675 = vld [vmem:[%s530 + $0x40] sm:$0xf]
        %v676 = vld [vmem:[%s530 + $0x44] sm:$0xf]
        %v677 = vld [vmem:[%s530 + $0x48] sm:$0xf]
        %v678 = vld [vmem:[%s530 + $0x4c] sm:$0xf]
        %v679 = vld [vmem:[%s530 + $0x50] sm:$0xf]
        %v680 = vld [vmem:[%s530 + $0x54] sm:$0xf]
        %v681 = vld [vmem:[%s530 + $0x58] sm:$0xf]
        %v682 = vld [vmem:[%s530 + $0x5c] sm:$0xf]
        %v683 = vld [vmem:[%s530 + $0x60] sm:$0xf]
        %v684 = vld [vmem:[%s530 + $0x64] sm:$0xf]
        %v685 = vld [vmem:[%s530 + $0x68] sm:$0xf]
        %v686 = vld [vmem:[%s530 + $0x6c] sm:$0xf]
        %v687 = vld [vmem:[%s530 + $0x70] sm:$0xf]
        %v688 = vld [vmem:[%s530 + $0x74] sm:$0xf]
        %v689 = vld [vmem:[%s530 + $0x78] sm:$0xf]
        %v690 = vld [vmem:[%s530 + $0x7c] sm:$0xf]
        %v691 = vld [vmem:[%s555] sm:$0xf]
        %v692 = vld [vmem:[%s555 + $0x4] sm:$0xf]
        %v693 = vld [vmem:[%s555 + $0x8] sm:$0xf]
        %v694 = vld [vmem:[%s555 + $0xc] sm:$0xf]
        %v695 = vld [vmem:[%s555 + $0x10] sm:$0xf]
        %v696 = vld [vmem:[%s555 + $0x14] sm:$0xf]
        %v697 = vld [vmem:[%s555 + $0x18] sm:$0xf]
        %v698 = vld [vmem:[%s555 + $0x1c] sm:$0xf]
        %v699 = vld [vmem:[%s555 + $0x20] sm:$0xf]
        %v700 = vld [vmem:[%s555 + $0x24] sm:$0xf]
        %v701 = vld [vmem:[%s555 + $0x28] sm:$0xf]
        %v702 = vld [vmem:[%s555 + $0x2c] sm:$0xf]
        %v703 = vld [vmem:[%s555 + $0x30] sm:$0xf]
        %v704 = vld [vmem:[%s555 + $0x34] sm:$0xf]
        %v705 = vld [vmem:[%s555 + $0x38] sm:$0xf]
        %v706 = vld [vmem:[%s555 + $0x3c] sm:$0xf]
        %v707 = vld [vmem:[%s648] sm:$0x1]
        %v709 = vperm.slane %v707, 0
        %v743 = vunpack.c.l.b16 %v659
        %v744 = vunpack.c.l.b16 %v660
        %v745 = vunpack.c.l.b16 %v661
        %v746 = vunpack.c.l.b16 %v662
        %v747 = vunpack.c.l.b16 %v663
        %v748 = vunpack.c.l.b16 %v664
        %v749 = vunpack.c.l.b16 %v665
        %v750 = vunpack.c.l.b16 %v666
        %v751 = vunpack.c.l.b16 %v667
        %v752 = vunpack.c.l.b16 %v668
        %v753 = vunpack.c.l.b16 %v669
        %v754 = vunpack.c.l.b16 %v670
        %v755 = vunpack.c.l.b16 %v671
        %v756 = vunpack.c.l.b16 %v672
        %v757 = vunpack.c.l.b16 %v673
        %v758 = vunpack.c.l.b16 %v674
        %v759 = vunpack.c.l.b16 %v675
        %v760 = vunpack.c.l.b16 %v676
        %v761 = vunpack.c.l.b16 %v677
        %v762 = vunpack.c.l.b16 %v678
        %v763 = vunpack.c.l.b16 %v679
        %v764 = vunpack.c.l.b16 %v680
        %v765 = vunpack.c.l.b16 %v681
        %v766 = vunpack.c.l.b16 %v682
        %v767 = vunpack.c.l.b16 %v683
        %v768 = vunpack.c.l.b16 %v684
        %v769 = vunpack.c.l.b16 %v685
        %v770 = vunpack.c.l.b16 %v686
        %v771 = vunpack.c.l.b16 %v687
        %v772 = vunpack.c.l.b16 %v688
        %v773 = vunpack.c.l.b16 %v689
        %v774 = vunpack.c.l.b16 %v690
        %v775 = vpack.c.b16 %v744, %v743
        %v776 = vpack.c.b16 %v746, %v745
        %v777 = vpack.c.b16 %v748, %v747
        %v778 = vpack.c.b16 %v750, %v749
        %v779 = vpack.c.b16 %v752, %v751
        %v780 = vpack.c.b16 %v754, %v753
        %v781 = vpack.c.b16 %v756, %v755
        %v782 = vpack.c.b16 %v758, %v757
        %v783 = vpack.c.b16 %v760, %v759
        %v784 = vpack.c.b16 %v762, %v761
        %v785 = vpack.c.b16 %v764, %v763
        %v786 = vpack.c.b16 %v766, %v765
        %v787 = vpack.c.b16 %v768, %v767
        %v788 = vpack.c.b16 %v770, %v769
        %v789 = vpack.c.b16 %v772, %v771
        %v790 = vpack.c.b16 %v774, %v773
        %v823 = vunpack.c.l.b16 %v691
        %v824 = vunpack.c.l.b16 %v692
        %v825 = vunpack.c.l.b16 %v693
        %v826 = vunpack.c.l.b16 %v694
        %v827 = vunpack.c.l.b16 %v695
        %v828 = vunpack.c.l.b16 %v696
        %v829 = vunpack.c.l.b16 %v697
        %v830 = vunpack.c.l.b16 %v698
        %v831 = vunpack.c.l.b16 %v699
        %v832 = vunpack.c.l.b16 %v700
        %v833 = vunpack.c.l.b16 %v701
        %v834 = vunpack.c.l.b16 %v702
        %v835 = vunpack.c.l.b16 %v703
        %v836 = vunpack.c.l.b16 %v704
        %v837 = vunpack.c.l.b16 %v705
        %v838 = vunpack.c.l.b16 %v706
        %v839 = vpack.c.b16 %v824, %v823
        %v840 = vpack.c.b16 %v826, %v825
        %v841 = vpack.c.b16 %v828, %v827
        %v842 = vpack.c.b16 %v830, %v829
        %v843 = vpack.c.b16 %v832, %v831
        %v844 = vpack.c.b16 %v834, %v833
        %v845 = vpack.c.b16 %v836, %v835
        %v846 = vpack.c.b16 %v838, %v837
        %855 = vmatpush.bf16.msra.mxu0 %v846
        %856 = vmatpush.bf16.msra.mxu0 %v845
        %857 = vmatpush.bf16.msra.mxu0 %v844
        %858 = vmatpush.bf16.msra.mxu0 %v843
        %859 = vmatpush.bf16.msra.mxu0 %v842
        %860 = vmatpush.bf16.msra.mxu0 %v841
        %861 = vmatpush.bf16.msra.mxu0 %v840
        %862 = vmatpush.bf16.msra.mxu0 %v839
        %863 = vmatmul.bf16.gmra.mxu0 %v775
        %v864 = vpop.f32.mrf.mxu0
        %v865 = vadd.f32 %v709, %v864
        %v866 = vpop.f32.mrf.mxu0
        %v867 = vadd.f32 %v709, %v866
        %868 = vmatmul.bf16.gmra.mxu0 %v776
        %v869 = vpop.f32.mrf.mxu0
        %v870 = vadd.f32 %v709, %v869
        %v871 = vpop.f32.mrf.mxu0
        %v872 = vadd.f32 %v709, %v871
        %873 = vmatmul.bf16.gmra.mxu0 %v777
        %v874 = vpop.f32.mrf.mxu0
        %v875 = vadd.f32 %v709, %v874
        %v876 = vpop.f32.mrf.mxu0
        %v877 = vadd.f32 %v709, %v876
        %878 = vmatmul.bf16.gmra.mxu0 %v778
        %v879 = vpop.f32.mrf.mxu0
        %v880 = vadd.f32 %v709, %v879
        %v881 = vpop.f32.mrf.mxu0
        %v882 = vadd.f32 %v709, %v881
        %883 = vmatmul.bf16.gmra.mxu0 %v779
        %v884 = vpop.f32.mrf.mxu0
        %v885 = vadd.f32 %v709, %v884
        %v886 = vpop.f32.mrf.mxu0
        %v887 = vadd.f32 %v709, %v886
        %888 = vmatmul.bf16.gmra.mxu0 %v780
        %v889 = vpop.f32.mrf.mxu0
        %v890 = vadd.f32 %v709, %v889
        %v891 = vpop.f32.mrf.mxu0
        %v892 = vadd.f32 %v709, %v891
        %893 = vmatmul.bf16.gmra.mxu0 %v781
        %v894 = vpop.f32.mrf.mxu0
        %v895 = vadd.f32 %v709, %v894
        %v896 = vpop.f32.mrf.mxu0
        %v897 = vadd.f32 %v709, %v896
        %898 = vmatmul.bf16.gmra.mxu0 %v782
        %v899 = vpop.f32.mrf.mxu0
        %v900 = vadd.f32 %v709, %v899
        %v901 = vpop.f32.mrf.mxu0
        %v902 = vadd.f32 %v709, %v901
        %903 = vmatmul.bf16.gmra.mxu0 %v783
        %v904 = vpop.f32.mrf.mxu0
        %v905 = vadd.f32 %v709, %v904
        %v906 = vpop.f32.mrf.mxu0
        %v907 = vadd.f32 %v709, %v906
        %908 = vmatmul.bf16.gmra.mxu0 %v784
        %v909 = vpop.f32.mrf.mxu0
        %v910 = vadd.f32 %v709, %v909
        %v911 = vpop.f32.mrf.mxu0
        %v912 = vadd.f32 %v709, %v911
        %913 = vmatmul.bf16.gmra.mxu0 %v785
        %v914 = vpop.f32.mrf.mxu0
        %v915 = vadd.f32 %v709, %v914
        %v916 = vpop.f32.mrf.mxu0
        %v917 = vadd.f32 %v709, %v916
        %918 = vmatmul.bf16.gmra.mxu0 %v786
        %v919 = vpop.f32.mrf.mxu0
        %v920 = vadd.f32 %v709, %v919
        %v921 = vpop.f32.mrf.mxu0
        %v922 = vadd.f32 %v709, %v921
        %923 = vmatmul.bf16.gmra.mxu0 %v787
        %v924 = vpop.f32.mrf.mxu0
        %v925 = vadd.f32 %v709, %v924
        %v926 = vpop.f32.mrf.mxu0
        %v927 = vadd.f32 %v709, %v926
        %928 = vmatmul.bf16.gmra.mxu0 %v788
        %v929 = vpop.f32.mrf.mxu0
        %v930 = vadd.f32 %v709, %v929
        %v931 = vpop.f32.mrf.mxu0
        %v932 = vadd.f32 %v709, %v931
        %933 = vmatmul.bf16.gmra.mxu0 %v789
        %v934 = vpop.f32.mrf.mxu0
        %v935 = vadd.f32 %v709, %v934
        %v936 = vpop.f32.mrf.mxu0
        %v937 = vadd.f32 %v709, %v936
        %938 = vmatmul.bf16.gmra.mxu0 %v790
        %v939 = vpop.f32.mrf.mxu0
        %v940 = vadd.f32 %v709, %v939
        %v941 = vpop.f32.mrf.mxu0
        %v942 = vadd.f32 %v709, %v941
        %943 = vdwg.mxu0
        %v944 = vmax.f32 %v865, 0.0
        %v945 = vmax.f32 %v867, 0.0
        %v946 = vmax.f32 %v870, 0.0
        %v947 = vmax.f32 %v872, 0.0
        %v948 = vmax.f32 %v875, 0.0
        %v949 = vmax.f32 %v877, 0.0
        %v950 = vmax.f32 %v880, 0.0
        %v951 = vmax.f32 %v882, 0.0
        %v952 = vmax.f32 %v885, 0.0
        %v953 = vmax.f32 %v887, 0.0
        %v954 = vmax.f32 %v890, 0.0
        %v955 = vmax.f32 %v892, 0.0
        %v956 = vmax.f32 %v895, 0.0
        %v957 = vmax.f32 %v897, 0.0
        %v958 = vmax.f32 %v900, 0.0
        %v959 = vmax.f32 %v902, 0.0
        %v960 = vmax.f32 %v905, 0.0
        %v961 = vmax.f32 %v907, 0.0
        %v962 = vmax.f32 %v910, 0.0
        %v963 = vmax.f32 %v912, 0.0
        %v964 = vmax.f32 %v915, 0.0
        %v965 = vmax.f32 %v917, 0.0
        %v966 = vmax.f32 %v920, 0.0
        %v967 = vmax.f32 %v922, 0.0
        %v968 = vmax.f32 %v925, 0.0
        %v969 = vmax.f32 %v927, 0.0
        %v970 = vmax.f32 %v930, 0.0
        %v971 = vmax.f32 %v932, 0.0
        %v972 = vmax.f32 %v935, 0.0
        %v973 = vmax.f32 %v937, 0.0
        %v974 = vmax.f32 %v940, 0.0
        %v975 = vmax.f32 %v942, 0.0
        %v976 = vpack.c.bf16 %v945, %v944
        %v977 = vpack.c.bf16 %v947, %v946
        %v978 = vpack.c.bf16 %v949, %v948
        %v979 = vpack.c.bf16 %v951, %v950
        %v980 = vpack.c.bf16 %v953, %v952
        %v981 = vpack.c.bf16 %v955, %v954
        %v982 = vpack.c.bf16 %v957, %v956
        %v983 = vpack.c.bf16 %v959, %v958
        %v984 = vpack.c.bf16 %v961, %v960
        %v985 = vpack.c.bf16 %v963, %v962
        %v986 = vpack.c.bf16 %v965, %v964
        %v987 = vpack.c.bf16 %v967, %v966
        %v988 = vpack.c.bf16 %v969, %v968
        %v989 = vpack.c.bf16 %v971, %v970
        %v990 = vpack.c.bf16 %v973, %v972
        %v991 = vpack.c.bf16 %v975, %v974
        %v992 = vld [vmem:[%s565] sm:$0xff]
        %v993 = vld [vmem:[%s565 + $0x8] sm:$0xf]
        %v994 = vld [vmem:[%s565 + $0xc] sm:$0xff]
        %v995 = vld [vmem:[%s565 + $0x14] sm:$0xf]
        %v996 = vld [vmem:[%s565 + $0x18] sm:$0xff]
        %v997 = vld [vmem:[%s565 + $0x20] sm:$0xf]
        %v998 = vld [vmem:[%s565 + $0x24] sm:$0xff]
        %v999 = vld [vmem:[%s565 + $0x2c] sm:$0xf]
        %v1000 = vld [vmem:[%s565 + $0x30] sm:$0xff]
        %v1001 = vld [vmem:[%s565 + $0x38] sm:$0xf]
        %v1002 = vld [vmem:[%s565 + $0x3c] sm:$0xff]
        %v1003 = vld [vmem:[%s565 + $0x44] sm:$0xf]
        %v1004 = vld [vmem:[%s565 + $0x48] sm:$0xff]
        %v1005 = vld [vmem:[%s565 + $0x50] sm:$0xf]
        %v1006 = vld [vmem:[%s565 + $0x54] sm:$0xff]
        %v1007 = vld [vmem:[%s565 + $0x5c] sm:$0xf]
        %v1008 = vld [vmem:[%s565 + $0x60] sm:$0xff]
        %v1009 = vld [vmem:[%s565 + $0x68] sm:$0xf]
        %v1010 = vld [vmem:[%s565 + $0x6c] sm:$0xff]
        %v1011 = vld [vmem:[%s565 + $0x74] sm:$0xf]
        %v1012 = vld [vmem:[%s565 + $0x78] sm:$0xff]
        %v1013 = vld [vmem:[%s565 + $0x80] sm:$0xf]
        %v1014 = vld [vmem:[%s565 + $0x84] sm:$0xff]
        %v1015 = vld [vmem:[%s565 + $0x8c] sm:$0xf]
        %v1016 = vld [vmem:[%s565 + $0x90] sm:$0xff]
        %v1017 = vld [vmem:[%s565 + $0x98] sm:$0xf]
        %v1018 = vld [vmem:[%s565 + $0x9c] sm:$0xff]
        %v1019 = vld [vmem:[%s565 + $0xa4] sm:$0xf]
        %v1020 = vld [vmem:[%s565 + $0xa8] sm:$0xff]
        %v1021 = vld [vmem:[%s565 + $0xb0] sm:$0xf]
        %v1022 = vld [vmem:[%s565 + $0xb4] sm:$0xff]
        %v1023 = vld [vmem:[%s565 + $0xbc] sm:$0xf]
        %v1024 = vld [vmem:[%s575] sm:$0x7]
        %v1026 = vperm.slane %v1024, 0
        %v1027 = vperm.slane %v1024, 1
        %v1028 = vperm.slane %v1024, 2
        %v1064 = vunpack.c.l.b16 %v992
        %v1065 = vunpack.c.h.b16 %v992
        %v1066 = vunpack.c.l.b16 %v993
        %v1067 = vunpack.c.l.b16 %v994
        %v1068 = vunpack.c.h.b16 %v994
        %v1069 = vunpack.c.l.b16 %v995
        %v1070 = vunpack.c.l.b16 %v996
        %v1071 = vunpack.c.h.b16 %v996
        %v1072 = vunpack.c.l.b16 %v997
        %v1073 = vunpack.c.l.b16 %v998
        %v1074 = vunpack.c.h.b16 %v998
        %v1075 = vunpack.c.l.b16 %v999
        %v1076 = vunpack.c.l.b16 %v1000
        %v1077 = vunpack.c.h.b16 %v1000
        %v1078 = vunpack.c.l.b16 %v1001
        %v1079 = vunpack.c.l.b16 %v1002
        %v1080 = vunpack.c.h.b16 %v1002
        %v1081 = vunpack.c.l.b16 %v1003
        %v1082 = vunpack.c.l.b16 %v1004
        %v1083 = vunpack.c.h.b16 %v1004
        %v1084 = vunpack.c.l.b16 %v1005
        %v1085 = vunpack.c.l.b16 %v1006
        %v1086 = vunpack.c.h.b16 %v1006
        %v1087 = vunpack.c.l.b16 %v1007
        %v1088 = vunpack.c.l.b16 %v1008
        %v1089 = vunpack.c.h.b16 %v1008
        %v1090 = vunpack.c.l.b16 %v1009
        %v1091 = vunpack.c.l.b16 %v1010
        %v1092 = vunpack.c.h.b16 %v1010
        %v1093 = vunpack.c.l.b16 %v1011
        %v1094 = vunpack.c.l.b16 %v1012
        %v1095 = vunpack.c.h.b16 %v1012
        %v1096 = vunpack.c.l.b16 %v1013
        %v1097 = vunpack.c.l.b16 %v1014
        %v1098 = vunpack.c.h.b16 %v1014
        %v1099 = vunpack.c.l.b16 %v1015
        %v1100 = vunpack.c.l.b16 %v1016
        %v1101 = vunpack.c.h.b16 %v1016
        %v1102 = vunpack.c.l.b16 %v1017
        %v1103 = vunpack.c.l.b16 %v1018
        %v1104 = vunpack.c.h.b16 %v1018
        %v1105 = vunpack.c.l.b16 %v1019
        %v1106 = vunpack.c.l.b16 %v1020
        %v1107 = vunpack.c.h.b16 %v1020
        %v1108 = vunpack.c.l.b16 %v1021
        %v1109 = vunpack.c.l.b16 %v1022
        %v1110 = vunpack.c.h.b16 %v1022
        %v1111 = vunpack.c.l.b16 %v1023
        %v1112 = vpack.c.b16 %v1067, %v1064
        %v1113 = vpack.c.b16 %v1068, %v1065
        %v1114 = vpack.c.b16 %v1069, %v1066
        %v1115 = vpack.c.b16 %v1073, %v1070
        %v1116 = vpack.c.b16 %v1074, %v1071
        %v1117 = vpack.c.b16 %v1075, %v1072
        %v1118 = vpack.c.b16 %v1079, %v1076
        %v1119 = vpack.c.b16 %v1080, %v1077
        %v1120 = vpack.c.b16 %v1081, %v1078
        %v1121 = vpack.c.b16 %v1085, %v1082
        %v1122 = vpack.c.b16 %v1086, %v1083
        %v1123 = vpack.c.b16 %v1087, %v1084
        %v1124 = vpack.c.b16 %v1091, %v1088
        %v1125 = vpack.c.b16 %v1092, %v1089
        %v1126 = vpack.c.b16 %v1093, %v1090
        %v1127 = vpack.c.b16 %v1097, %v1094
        %v1128 = vpack.c.b16 %v1098, %v1095
        %v1129 = vpack.c.b16 %v1099, %v1096
        %v1130 = vpack.c.b16 %v1103, %v1100
        %v1131 = vpack.c.b16 %v1104, %v1101
        %v1132 = vpack.c.b16 %v1105, %v1102
        %v1133 = vpack.c.b16 %v1109, %v1106
        %v1134 = vpack.c.b16 %v1110, %v1107
        %v1135 = vpack.c.b16 %v1111, %v1108
        %1160 = vmatpush.bf16.msra.mxu0 %v1133
        %1161 = vmatpush.bf16.msra.mxu0 %v1130
        %1162 = vmatpush.bf16.msra.mxu0 %v1127
        %1163 = vmatpush.bf16.msra.mxu0 %v1124
        %1164 = vmatpush.bf16.msra.mxu0 %v1121
        %1165 = vmatpush.bf16.msra.mxu0 %v1118
        %1166 = vmatpush.bf16.msra.mxu0 %v1115
        %1167 = vmatpush.bf16.msra.mxu0 %v1112
        %1168 = vmatmul.bf16.gmra.mxu0 %v976
        %v1169 = vpop.f32.mrf.mxu0
        %v1170 = vadd.f32 %v1026, %v1169
        %v1171 = vpop.f32.mrf.mxu0
        %v1172 = vadd.f32 %v1026, %v1171
        %1173 = vmatmul.bf16.gmra.mxu0 %v977
        %v1174 = vpop.f32.mrf.mxu0
        %v1175 = vadd.f32 %v1026, %v1174
        %v1176 = vpop.f32.mrf.mxu0
        %v1177 = vadd.f32 %v1026, %v1176
        %1178 = vmatmul.bf16.gmra.mxu0 %v978
        %v1179 = vpop.f32.mrf.mxu0
        %v1180 = vadd.f32 %v1026, %v1179
        %v1181 = vpop.f32.mrf.mxu0
        %v1182 = vadd.f32 %v1026, %v1181
        %1183 = vmatmul.bf16.gmra.mxu0 %v979
        %v1184 = vpop.f32.mrf.mxu0
        %v1185 = vadd.f32 %v1026, %v1184
        %v1186 = vpop.f32.mrf.mxu0
        %v1187 = vadd.f32 %v1026, %v1186
        %1188 = vmatmul.bf16.gmra.mxu0 %v980
        %v1189 = vpop.f32.mrf.mxu0
        %v1190 = vadd.f32 %v1026, %v1189
        %v1191 = vpop.f32.mrf.mxu0
        %v1192 = vadd.f32 %v1026, %v1191
        %1193 = vmatmul.bf16.gmra.mxu0 %v981
        %v1194 = vpop.f32.mrf.mxu0
        %v1195 = vadd.f32 %v1026, %v1194
        %v1196 = vpop.f32.mrf.mxu0
        %v1197 = vadd.f32 %v1026, %v1196
        %1198 = vmatmul.bf16.gmra.mxu0 %v982
        %v1199 = vpop.f32.mrf.mxu0
        %v1200 = vadd.f32 %v1026, %v1199
        %v1201 = vpop.f32.mrf.mxu0
        %v1202 = vadd.f32 %v1026, %v1201
        %1203 = vmatmul.bf16.gmra.mxu0 %v983
        %v1204 = vpop.f32.mrf.mxu0
        %v1205 = vadd.f32 %v1026, %v1204
        %v1206 = vpop.f32.mrf.mxu0
        %v1207 = vadd.f32 %v1026, %v1206
        %1208 = vmatmul.bf16.gmra.mxu0 %v984
        %v1209 = vpop.f32.mrf.mxu0
        %v1210 = vadd.f32 %v1026, %v1209
        %v1211 = vpop.f32.mrf.mxu0
        %v1212 = vadd.f32 %v1026, %v1211
        %1213 = vmatmul.bf16.gmra.mxu0 %v985
        %v1214 = vpop.f32.mrf.mxu0
        %v1215 = vadd.f32 %v1026, %v1214
        %v1216 = vpop.f32.mrf.mxu0
        %v1217 = vadd.f32 %v1026, %v1216
        %1218 = vmatmul.bf16.gmra.mxu0 %v986
        %v1219 = vpop.f32.mrf.mxu0
        %v1220 = vadd.f32 %v1026, %v1219
        %v1221 = vpop.f32.mrf.mxu0
        %v1222 = vadd.f32 %v1026, %v1221
        %1223 = vmatmul.bf16.gmra.mxu0 %v987
        %v1224 = vpop.f32.mrf.mxu0
        %v1225 = vadd.f32 %v1026, %v1224
        %v1226 = vpop.f32.mrf.mxu0
        %v1227 = vadd.f32 %v1026, %v1226
        %1228 = vmatmul.bf16.gmra.mxu0 %v988
        %v1229 = vpop.f32.mrf.mxu0
        %v1230 = vadd.f32 %v1026, %v1229
        %v1231 = vpop.f32.mrf.mxu0
        %v1232 = vadd.f32 %v1026, %v1231
        %1233 = vmatmul.bf16.gmra.mxu0 %v989
        %v1234 = vpop.f32.mrf.mxu0
        %v1235 = vadd.f32 %v1026, %v1234
        %v1236 = vpop.f32.mrf.mxu0
        %v1237 = vadd.f32 %v1026, %v1236
        %1238 = vmatmul.bf16.gmra.mxu0 %v990
        %v1239 = vpop.f32.mrf.mxu0
        %v1240 = vadd.f32 %v1026, %v1239
        %v1241 = vpop.f32.mrf.mxu0
        %v1242 = vadd.f32 %v1026, %v1241
        %1243 = vmatmul.bf16.gmra.mxu0 %v991
        %v1244 = vpop.f32.mrf.mxu0
        %v1245 = vadd.f32 %v1026, %v1244
        %v1246 = vpop.f32.mrf.mxu0
        %v1247 = vadd.f32 %v1026, %v1246
        %1248 = vdwg.mxu0
        %1249 = vmatpush.bf16.msra.mxu0 %v1134
        %1250 = vmatpush.bf16.msra.mxu0 %v1131
        %1251 = vmatpush.bf16.msra.mxu0 %v1128
        %1252 = vmatpush.bf16.msra.mxu0 %v1125
        %1253 = vmatpush.bf16.msra.mxu0 %v1122
        %1254 = vmatpush.bf16.msra.mxu0 %v1119
        %1255 = vmatpush.bf16.msra.mxu0 %v1116
        %1256 = vmatpush.bf16.msra.mxu0 %v1113
        %1257 = vmatmul.bf16.gmra.mxu0 %v976
        %v1258 = vpop.f32.mrf.mxu0
        %v1259 = vadd.f32 %v1027, %v1258
        %v1260 = vpop.f32.mrf.mxu0
        %v1261 = vadd.f32 %v1027, %v1260
        %1262 = vmatmul.bf16.gmra.mxu0 %v977
        %v1263 = vpop.f32.mrf.mxu0
        %v1264 = vadd.f32 %v1027, %v1263
        %v1265 = vpop.f32.mrf.mxu0
        %v1266 = vadd.f32 %v1027, %v1265
        %1267 = vmatmul.bf16.gmra.mxu0 %v978
        %v1268 = vpop.f32.mrf.mxu0
        %v1269 = vadd.f32 %v1027, %v1268
        %v1270 = vpop.f32.mrf.mxu0
        %v1271 = vadd.f32 %v1027, %v1270
        %1272 = vmatmul.bf16.gmra.mxu0 %v979
        %v1273 = vpop.f32.mrf.mxu0
        %v1274 = vadd.f32 %v1027, %v1273
        %v1275 = vpop.f32.mrf.mxu0
        %v1276 = vadd.f32 %v1027, %v1275
        %1277 = vmatmul.bf16.gmra.mxu0 %v980
        %v1278 = vpop.f32.mrf.mxu0
        %v1279 = vadd.f32 %v1027, %v1278
        %v1280 = vpop.f32.mrf.mxu0
        %v1281 = vadd.f32 %v1027, %v1280
        %1282 = vmatmul.bf16.gmra.mxu0 %v981
        %v1283 = vpop.f32.mrf.mxu0
        %v1284 = vadd.f32 %v1027, %v1283
        %v1285 = vpop.f32.mrf.mxu0
        %v1286 = vadd.f32 %v1027, %v1285
        %1287 = vmatmul.bf16.gmra.mxu0 %v982
        %v1288 = vpop.f32.mrf.mxu0
        %v1289 = vadd.f32 %v1027, %v1288
        %v1290 = vpop.f32.mrf.mxu0
        %v1291 = vadd.f32 %v1027, %v1290
        %1292 = vmatmul.bf16.gmra.mxu0 %v983
        %v1293 = vpop.f32.mrf.mxu0
        %v1294 = vadd.f32 %v1027, %v1293
        %v1295 = vpop.f32.mrf.mxu0
        %v1296 = vadd.f32 %v1027, %v1295
        %1297 = vmatmul.bf16.gmra.mxu0 %v984
        %v1298 = vpop.f32.mrf.mxu0
        %v1299 = vadd.f32 %v1027, %v1298
        %v1300 = vpop.f32.mrf.mxu0
        %v1301 = vadd.f32 %v1027, %v1300
        %1302 = vmatmul.bf16.gmra.mxu0 %v985
        %v1303 = vpop.f32.mrf.mxu0
        %v1304 = vadd.f32 %v1027, %v1303
        %v1305 = vpop.f32.mrf.mxu0
        %v1306 = vadd.f32 %v1027, %v1305
        %1307 = vmatmul.bf16.gmra.mxu0 %v986
        %v1308 = vpop.f32.mrf.mxu0
        %v1309 = vadd.f32 %v1027, %v1308
        %v1310 = vpop.f32.mrf.mxu0
        %v1311 = vadd.f32 %v1027, %v1310
        %1312 = vmatmul.bf16.gmra.mxu0 %v987
        %v1313 = vpop.f32.mrf.mxu0
        %v1314 = vadd.f32 %v1027, %v1313
        %v1315 = vpop.f32.mrf.mxu0
        %v1316 = vadd.f32 %v1027, %v1315
        %1317 = vmatmul.bf16.gmra.mxu0 %v988
        %v1318 = vpop.f32.mrf.mxu0
        %v1319 = vadd.f32 %v1027, %v1318
        %v1320 = vpop.f32.mrf.mxu0
        %v1321 = vadd.f32 %v1027, %v1320
        %1322 = vmatmul.bf16.gmra.mxu0 %v989
        %v1323 = vpop.f32.mrf.mxu0
        %v1324 = vadd.f32 %v1027, %v1323
        %v1325 = vpop.f32.mrf.mxu0
        %v1326 = vadd.f32 %v1027, %v1325
        %1327 = vmatmul.bf16.gmra.mxu0 %v990
        %v1328 = vpop.f32.mrf.mxu0
        %v1329 = vadd.f32 %v1027, %v1328
        %v1330 = vpop.f32.mrf.mxu0
        %v1331 = vadd.f32 %v1027, %v1330
        %1332 = vmatmul.bf16.gmra.mxu0 %v991
        %v1333 = vpop.f32.mrf.mxu0
        %v1334 = vadd.f32 %v1027, %v1333
        %v1335 = vpop.f32.mrf.mxu0
        %v1336 = vadd.f32 %v1027, %v1335
        %1337 = vdwg.mxu0
        %1338 = vmatpush.bf16.msra.mxu0 %v1135
        %1339 = vmatpush.bf16.msra.mxu0 %v1132
        %1340 = vmatpush.bf16.msra.mxu0 %v1129
        %1341 = vmatpush.bf16.msra.mxu0 %v1126
        %1342 = vmatpush.bf16.msra.mxu0 %v1123
        %1343 = vmatpush.bf16.msra.mxu0 %v1120
        %1344 = vmatpush.bf16.msra.mxu0 %v1117
        %1345 = vmatpush.bf16.msra.mxu0 %v1114
        %1346 = vmatmul.bf16.gmra.mxu0 %v976
        %v1347 = vpop.f32.mrf.mxu0
        %v1348 = vadd.f32 %v1028, %v1347
        %v1349 = vpop.f32.mrf.mxu0
        %v1350 = vadd.f32 %v1028, %v1349
        %1351 = vmatmul.bf16.gmra.mxu0 %v977
        %v1352 = vpop.f32.mrf.mxu0
        %v1353 = vadd.f32 %v1028, %v1352
        %v1354 = vpop.f32.mrf.mxu0
        %v1355 = vadd.f32 %v1028, %v1354
        %1356 = vmatmul.bf16.gmra.mxu0 %v978
        %v1357 = vpop.f32.mrf.mxu0
        %v1358 = vadd.f32 %v1028, %v1357
        %v1359 = vpop.f32.mrf.mxu0
        %v1360 = vadd.f32 %v1028, %v1359
        %1361 = vmatmul.bf16.gmra.mxu0 %v979
        %v1362 = vpop.f32.mrf.mxu0
        %v1363 = vadd.f32 %v1028, %v1362
        %v1364 = vpop.f32.mrf.mxu0
        %v1365 = vadd.f32 %v1028, %v1364
        %1366 = vmatmul.bf16.gmra.mxu0 %v980
        %v1367 = vpop.f32.mrf.mxu0
        %v1368 = vadd.f32 %v1028, %v1367
        %v1369 = vpop.f32.mrf.mxu0
        %v1370 = vadd.f32 %v1028, %v1369
        %1371 = vmatmul.bf16.gmra.mxu0 %v981
        %v1372 = vpop.f32.mrf.mxu0
        %v1373 = vadd.f32 %v1028, %v1372
        %v1374 = vpop.f32.mrf.mxu0
        %v1375 = vadd.f32 %v1028, %v1374
        %1376 = vmatmul.bf16.gmra.mxu0 %v982
        %v1377 = vpop.f32.mrf.mxu0
        %v1378 = vadd.f32 %v1028, %v1377
        %v1379 = vpop.f32.mrf.mxu0
        %v1380 = vadd.f32 %v1028, %v1379
        %1381 = vmatmul.bf16.gmra.mxu0 %v983
        %v1382 = vpop.f32.mrf.mxu0
        %v1383 = vadd.f32 %v1028, %v1382
        %v1384 = vpop.f32.mrf.mxu0
        %v1385 = vadd.f32 %v1028, %v1384
        %1386 = vmatmul.bf16.gmra.mxu0 %v984
        %v1387 = vpop.f32.mrf.mxu0
        %v1388 = vadd.f32 %v1028, %v1387
        %v1389 = vpop.f32.mrf.mxu0
        %v1390 = vadd.f32 %v1028, %v1389
        %1391 = vmatmul.bf16.gmra.mxu0 %v985
        %v1392 = vpop.f32.mrf.mxu0
        %v1393 = vadd.f32 %v1028, %v1392
        %v1394 = vpop.f32.mrf.mxu0
        %v1395 = vadd.f32 %v1028, %v1394
        %1396 = vmatmul.bf16.gmra.mxu0 %v986
        %v1397 = vpop.f32.mrf.mxu0
        %v1398 = vadd.f32 %v1028, %v1397
        %v1399 = vpop.f32.mrf.mxu0
        %v1400 = vadd.f32 %v1028, %v1399
        %1401 = vmatmul.bf16.gmra.mxu0 %v987
        %v1402 = vpop.f32.mrf.mxu0
        %v1403 = vadd.f32 %v1028, %v1402
        %v1404 = vpop.f32.mrf.mxu0
        %v1405 = vadd.f32 %v1028, %v1404
        %1406 = vmatmul.bf16.gmra.mxu0 %v988
        %v1407 = vpop.f32.mrf.mxu0
        %v1408 = vadd.f32 %v1028, %v1407
        %v1409 = vpop.f32.mrf.mxu0
        %v1410 = vadd.f32 %v1028, %v1409
        %1411 = vmatmul.bf16.gmra.mxu0 %v989
        %v1412 = vpop.f32.mrf.mxu0
        %v1413 = vadd.f32 %v1028, %v1412
        %v1414 = vpop.f32.mrf.mxu0
        %v1415 = vadd.f32 %v1028, %v1414
        %1416 = vmatmul.bf16.gmra.mxu0 %v990
        %v1417 = vpop.f32.mrf.mxu0
        %v1418 = vadd.f32 %v1028, %v1417
        %v1419 = vpop.f32.mrf.mxu0
        %v1420 = vadd.f32 %v1028, %v1419
        %1421 = vmatmul.bf16.gmra.mxu0 %v991
        %v1422 = vpop.f32.mrf.mxu0
        %v1423 = vadd.f32 %v1028, %v1422
        %v1424 = vpop.f32.mrf.mxu0
        %v1425 = vadd.f32 %v1028, %v1424
        %1426 = vdwg.mxu0
        %v1427 = vpack.c.bf16 %v1259, %v1170
        %v1428 = vpack.c.bf16 %v1348, %v1348
        %v1429 = vpack.c.bf16 %v1261, %v1172
        %v1430 = vpack.c.bf16 %v1350, %v1350
        %v1431 = vpack.c.bf16 %v1264, %v1175
        %v1432 = vpack.c.bf16 %v1353, %v1353
        %v1433 = vpack.c.bf16 %v1266, %v1177
        %v1434 = vpack.c.bf16 %v1355, %v1355
        %v1435 = vpack.c.bf16 %v1269, %v1180
        %v1436 = vpack.c.bf16 %v1358, %v1358
        %v1437 = vpack.c.bf16 %v1271, %v1182
        %v1438 = vpack.c.bf16 %v1360, %v1360
        %v1439 = vpack.c.bf16 %v1274, %v1185
        %v1440 = vpack.c.bf16 %v1363, %v1363
        %v1441 = vpack.c.bf16 %v1276, %v1187
        %v1442 = vpack.c.bf16 %v1365, %v1365
        %v1443 = vpack.c.bf16 %v1279, %v1190
        %v1444 = vpack.c.bf16 %v1368, %v1368
        %v1445 = vpack.c.bf16 %v1281, %v1192
        %v1446 = vpack.c.bf16 %v1370, %v1370
        %v1447 = vpack.c.bf16 %v1284, %v1195
        %v1448 = vpack.c.bf16 %v1373, %v1373
        %v1449 = vpack.c.bf16 %v1286, %v1197
        %v1450 = vpack.c.bf16 %v1375, %v1375
        %v1451 = vpack.c.bf16 %v1289, %v1200
        %v1452 = vpack.c.bf16 %v1378, %v1378
        %v1453 = vpack.c.bf16 %v1291, %v1202
        %v1454 = vpack.c.bf16 %v1380, %v1380
        %v1455 = vpack.c.bf16 %v1294, %v1205
        %v1456 = vpack.c.bf16 %v1383, %v1383
        %v1457 = vpack.c.bf16 %v1296, %v1207
        %v1458 = vpack.c.bf16 %v1385, %v1385
        %v1459 = vpack.c.bf16 %v1299, %v1210
        %v1460 = vpack.c.bf16 %v1388, %v1388
        %v1461 = vpack.c.bf16 %v1301, %v1212
        %v1462 = vpack.c.bf16 %v1390, %v1390
        %v1463 = vpack.c.bf16 %v1304, %v1215
        %v1464 = vpack.c.bf16 %v1393, %v1393
        %v1465 = vpack.c.bf16 %v1306, %v1217
        %v1466 = vpack.c.bf16 %v1395, %v1395
        %v1467 = vpack.c.bf16 %v1309, %v1220
        %v1468 = vpack.c.bf16 %v1398, %v1398
        %v1469 = vpack.c.bf16 %v1311, %v1222
        %v1470 = vpack.c.bf16 %v1400, %v1400
        %v1471 = vpack.c.bf16 %v1314, %v1225
        %v1472 = vpack.c.bf16 %v1403, %v1403
        %v1473 = vpack.c.bf16 %v1316, %v1227
        %v1474 = vpack.c.bf16 %v1405, %v1405
        %v1475 = vpack.c.bf16 %v1319, %v1230
        %v1476 = vpack.c.bf16 %v1408, %v1408
        %v1477 = vpack.c.bf16 %v1321, %v1232
        %v1478 = vpack.c.bf16 %v1410, %v1410
        %v1479 = vpack.c.bf16 %v1324, %v1235
        %v1480 = vpack.c.bf16 %v1413, %v1413
        %v1481 = vpack.c.bf16 %v1326, %v1237
        %v1482 = vpack.c.bf16 %v1415, %v1415
        %v1483 = vpack.c.bf16 %v1329, %v1240
        %v1484 = vpack.c.bf16 %v1418, %v1418
        %v1485 = vpack.c.bf16 %v1331, %v1242
        %v1486 = vpack.c.bf16 %v1420, %v1420
        %v1487 = vpack.c.bf16 %v1334, %v1245
        %v1488 = vpack.c.bf16 %v1423, %v1423
        %v1489 = vpack.c.bf16 %v1336, %v1247
        %v1490 = vpack.c.bf16 %v1425, %v1425
        %s1491 = sld [smem:[#allocation5 + %s51]]
        %v1492 = vld [vmem:[%s540] sm:$0x77]
        %v1493 = vlaneseq
        %v1494 = vshrl.u32 %v1493, 7
        %v1495 = vadd.s32 %v1494, 8
        %v1496 = vadd.s32 %v1494, 16
        %v1497 = vperm.slane %v1492, 0
        %v1498 = vperm.slane %v1492, 4
        %v1499 = vperm.slane %v1497, 0
        %v1500 = vperm.slane %v1498, 0
        %vm1501 = vcmp.eq.s32.totalorder %v1494, %v1499
        %vm1502 = vcmp.eq.s32.totalorder %v1494, %v1500
        %vm1503 = vcmp.eq.s32.totalorder %v1495, %v1499
        %vm1504 = vcmp.eq.s32.totalorder %v1495, %v1500
        %vm1505 = vcmp.eq.s32.totalorder %v1496, %v1499
        %vm1506 = vcmp.eq.s32.totalorder %v1496, %v1500
        %v1507 = vsel %vm1501, 1, 0
        %v1508 = vsel %vm1502, 1, 0
        %v1509 = vsel %vm1503, 1, 0
        %v1510 = vsel %vm1504, 1, 0
        %v1511 = vsel %vm1505, 1, 0
        %v1512 = vsel %vm1506, 1, 0
        %v1513 = vcvt.s32.f32 %v1507
        %v1514 = vcvt.s32.f32 %v1508
        %v1515 = vcvt.s32.f32 %v1509
        %v1516 = vcvt.s32.f32 %v1510
        %v1517 = vcvt.s32.f32 %v1511
        %v1518 = vcvt.s32.f32 %v1512
        %v1519 = vpack.c.bf16 %v1515, %v1513
        %v1520 = vpack.c.bf16 %v1516, %v1514
        %v1521 = vpack.c.bf16 %v1517, %v1517
        %v1522 = vpack.c.bf16 %v1518, %v1518
        %v1523 = vld [vmem:[#allocation2] sm:$0xff]
        %v1524 = vld [vmem:[#allocation2 + $0x8] sm:$0xff]
        %v1525 = vld [vmem:[#allocation2 + $0x10] sm:$0xff]
        %v1558 = vunpack.c.l.b16 %v1427
        %v1559 = vunpack.c.l.b16 %v1429
        %v1560 = vunpack.c.l.b16 %v1431
        %v1561 = vunpack.c.l.b16 %v1433
        %v1562 = vunpack.c.l.b16 %v1435
        %v1563 = vunpack.c.l.b16 %v1437
        %v1564 = vunpack.c.l.b16 %v1439
        %v1565 = vunpack.c.l.b16 %v1441
        %v1566 = vunpack.c.l.b16 %v1443
        %v1567 = vunpack.c.l.b16 %v1445
        %v1568 = vunpack.c.l.b16 %v1447
        %v1569 = vunpack.c.l.b16 %v1449
        %v1570 = vunpack.c.l.b16 %v1451
        %v1571 = vunpack.c.l.b16 %v1453
        %v1572 = vunpack.c.l.b16 %v1455
        %v1573 = vunpack.c.l.b16 %v1457
        %v1574 = vunpack.c.l.b16 %v1459
        %v1575 = vunpack.c.l.b16 %v1461
        %v1576 = vunpack.c.l.b16 %v1463
        %v1577 = vunpack.c.l.b16 %v1465
        %v1578 = vunpack.c.l.b16 %v1467
        %v1579 = vunpack.c.l.b16 %v1469
        %v1580 = vunpack.c.l.b16 %v1471
        %v1581 = vunpack.c.l.b16 %v1473
        %v1582 = vunpack.c.l.b16 %v1475
        %v1583 = vunpack.c.l.b16 %v1477
        %v1584 = vunpack.c.l.b16 %v1479
        %v1585 = vunpack.c.l.b16 %v1481
        %v1586 = vunpack.c.l.b16 %v1483
        %v1587 = vunpack.c.l.b16 %v1485
        %v1588 = vunpack.c.l.b16 %v1487
        %v1589 = vunpack.c.l.b16 %v1489
        %v1590 = vpack.c.b16 %v1559, %v1558
        %v1591 = vpack.c.b16 %v1561, %v1560
        %v1592 = vpack.c.b16 %v1563, %v1562
        %v1593 = vpack.c.b16 %v1565, %v1564
        %v1594 = vpack.c.b16 %v1567, %v1566
        %v1595 = vpack.c.b16 %v1569, %v1568
        %v1596 = vpack.c.b16 %v1571, %v1570
        %v1597 = vpack.c.b16 %v1573, %v1572
        %v1598 = vpack.c.b16 %v1575, %v1574
        %v1599 = vpack.c.b16 %v1577, %v1576
        %v1600 = vpack.c.b16 %v1579, %v1578
        %v1601 = vpack.c.b16 %v1581, %v1580
        %v1602 = vpack.c.b16 %v1583, %v1582
        %v1603 = vpack.c.b16 %v1585, %v1584
        %v1604 = vpack.c.b16 %v1587, %v1586
        %v1605 = vpack.c.b16 %v1589, %v1588
        %1622 = vmatpush.bf16.msra.mxu0 %v1597
        %1623 = vmatpush.bf16.msra.mxu0 %v1596
        %1624 = vmatpush.bf16.msra.mxu0 %v1595
        %1625 = vmatpush.bf16.msra.mxu0 %v1594
        %1626 = vmatpush.bf16.msra.mxu0 %v1593
        %1627 = vmatpush.bf16.msra.mxu0 %v1592
        %1628 = vmatpush.bf16.msra.mxu0 %v1591
        %1629 = vmatpush.bf16.msra.mxu0 %v1590
        %1630 = vmatmul.bf16.gmra.mxu0 %v1519
        %v1631 = vpop.f32.mrf.mxu0
        %v1632 = vadd.f32 0.0, %v1631
        %v1633 = vpop.f32.mrf.mxu0
        %v1634 = vadd.f32 0.0, %v1633
        %1635 = vmatmul.bf16.gmra.mxu0 %v1521
        %v1636 = vpop.f32.mrf.mxu0
        %v1637 = vadd.f32 0.0, %v1636
        %v1638 = vpop.f32.mrf.mxu0
        %1639 = vdwg.mxu0
        %1640 = vmatpush.bf16.msra.mxu0 %v1605
        %1641 = vmatpush.bf16.msra.mxu0 %v1604
        %1642 = vmatpush.bf16.msra.mxu0 %v1603
        %1643 = vmatpush.bf16.msra.mxu0 %v1602
        %1644 = vmatpush.bf16.msra.mxu0 %v1601
        %1645 = vmatpush.bf16.msra.mxu0 %v1600
        %1646 = vmatpush.bf16.msra.mxu0 %v1599
        %1647 = vmatpush.bf16.msra.mxu0 %v1598
        %1648 = vmatmul.bf16.gmra.mxu0 %v1520
        %v1649 = vpop.f32.mrf.mxu0
        %v1650 = vadd.f32 %v1632, %v1649
        %v1651 = vpop.f32.mrf.mxu0
        %v1652 = vadd.f32 %v1634, %v1651
        %1653 = vmatmul.bf16.gmra.mxu0 %v1522
        %v1654 = vpop.f32.mrf.mxu0
        %v1655 = vadd.f32 %v1637, %v1654
        %v1656 = vpop.f32.mrf.mxu0
        %1657 = vdwg.mxu0
        %v1658 = vadd.f32 %v1523, %v1650
        %v1659 = vadd.f32 %v1524, %v1652
        %v1660 = vadd.f32 %v1525, %v1655
        %1661 = vst [vmem:[#allocation2] sm:$0xff] %v1658
        %1662 = vst [vmem:[#allocation2 + $0x8] sm:$0xff] %v1659
        %1663 = vst [vmem:[#allocation2 + $0x10] sm:$0xff] %v1660
        %p1664 = scmp.gt.s32.totalorder %s1491, 1
        // Predicated region
        $region101: #{tpu_custom_call.1} parent=63 // pred_check
          %p1665 = pneg %p1664
        $region102: #{tpu_custom_call.1} parent=63 // pred_check_branch
          %1667 = sbr.rel (%p1665) target = $region104
        $region103: #{tpu_custom_call.1} parent=63 // pred_region
          %v1668 = vperm.slane %v1492, 1
          %v1669 = vperm.slane %v1492, 5
          %v1670 = vperm.slane %v1668, 1
          %v1671 = vperm.slane %v1669, 1
          %vm1672 = vcmp.eq.s32.totalorder %v1494, %v1670
          %vm1673 = vcmp.eq.s32.totalorder %v1494, %v1671
          %vm1674 = vcmp.eq.s32.totalorder %v1495, %v1670
          %vm1675 = vcmp.eq.s32.totalorder %v1495, %v1671
          %vm1676 = vcmp.eq.s32.totalorder %v1496, %v1670
          %vm1677 = vcmp.eq.s32.totalorder %v1496, %v1671
          %v1678 = vsel %vm1672, 1, 0
          %v1679 = vsel %vm1673, 1, 0
          %v1680 = vsel %vm1674, 1, 0
          %v1681 = vsel %vm1675, 1, 0
          %v1682 = vsel %vm1676, 1, 0
          %v1683 = vsel %vm1677, 1, 0
          %v1684 = vcvt.s32.f32 %v1678
          %v1685 = vcvt.s32.f32 %v1679
          %v1686 = vcvt.s32.f32 %v1680
          %v1687 = vcvt.s32.f32 %v1681
          %v1688 = vcvt.s32.f32 %v1682
          %v1689 = vcvt.s32.f32 %v1683
          %v1690 = vpack.c.bf16 %v1686, %v1684
          %v1691 = vpack.c.bf16 %v1687, %v1685
          %v1692 = vpack.c.bf16 %v1688, %v1688
          %v1693 = vpack.c.bf16 %v1689, %v1689
          %v1694 = vld [vmem:[#allocation2] sm:$0xff]
          %v1695 = vld [vmem:[#allocation2 + $0x8] sm:$0xff]
          %v1696 = vld [vmem:[#allocation2 + $0x10] sm:$0xff]
          %v1697 = vunpack.c.h.b16 %v1427
          %v1698 = vunpack.c.h.b16 %v1429
          %v1699 = vunpack.c.h.b16 %v1431
          %v1700 = vunpack.c.h.b16 %v1433
          %v1701 = vunpack.c.h.b16 %v1435
          %v1702 = vunpack.c.h.b16 %v1437
          %v1703 = vunpack.c.h.b16 %v1439
          %v1704 = vunpack.c.h.b16 %v1441
          %v1705 = vunpack.c.h.b16 %v1443
          %v1706 = vunpack.c.h.b16 %v1445
          %v1707 = vunpack.c.h.b16 %v1447
          %v1708 = vunpack.c.h.b16 %v1449
          %v1709 = vunpack.c.h.b16 %v1451
          %v1710 = vunpack.c.h.b16 %v1453
          %v1711 = vunpack.c.h.b16 %v1455
          %v1712 = vunpack.c.h.b16 %v1457
          %v1713 = vunpack.c.h.b16 %v1459
          %v1714 = vunpack.c.h.b16 %v1461
          %v1715 = vunpack.c.h.b16 %v1463
          %v1716 = vunpack.c.h.b16 %v1465
          %v1717 = vunpack.c.h.b16 %v1467
          %v1718 = vunpack.c.h.b16 %v1469
          %v1719 = vunpack.c.h.b16 %v1471
          %v1720 = vunpack.c.h.b16 %v1473
          %v1721 = vunpack.c.h.b16 %v1475
          %v1722 = vunpack.c.h.b16 %v1477
          %v1723 = vunpack.c.h.b16 %v1479
          %v1724 = vunpack.c.h.b16 %v1481
          %v1725 = vunpack.c.h.b16 %v1483
          %v1726 = vunpack.c.h.b16 %v1485
          %v1727 = vunpack.c.h.b16 %v1487
          %v1728 = vunpack.c.h.b16 %v1489
          %v1729 = vpack.c.b16 %v1698, %v1697
          %v1730 = vpack.c.b16 %v1700, %v1699
          %v1731 = vpack.c.b16 %v1702, %v1701
          %v1732 = vpack.c.b16 %v1704, %v1703
          %v1733 = vpack.c.b16 %v1706, %v1705
          %v1734 = vpack.c.b16 %v1708, %v1707
          %v1735 = vpack.c.b16 %v1710, %v1709
          %v1736 = vpack.c.b16 %v1712, %v1711
          %v1737 = vpack.c.b16 %v1714, %v1713
          %v1738 = vpack.c.b16 %v1716, %v1715
          %v1739 = vpack.c.b16 %v1718, %v1717
          %v1740 = vpack.c.b16 %v1720, %v1719
          %v1741 = vpack.c.b16 %v1722, %v1721
          %v1742 = vpack.c.b16 %v1724, %v1723
          %v1743 = vpack.c.b16 %v1726, %v1725
          %v1744 = vpack.c.b16 %v1728, %v1727
          %1761 = vmatpush.bf16.msra.mxu0 %v1736
          %1762 = vmatpush.bf16.msra.mxu0 %v1735
          %1763 = vmatpush.bf16.msra.mxu0 %v1734
          %1764 = vmatpush.bf16.msra.mxu0 %v1733
          %1765 = vmatpush.bf16.msra.mxu0 %v1732
          %1766 = vmatpush.bf16.msra.mxu0 %v1731
          %1767 = vmatpush.bf16.msra.mxu0 %v1730
          %1768 = vmatpush.bf16.msra.mxu0 %v1729
          %1769 = vmatmul.bf16.gmra.mxu0 %v1690
          %v1770 = vpop.f32.mrf.mxu0
          %v1771 = vadd.f32 0.0, %v1770
          %v1772 = vpop.f32.mrf.mxu0
          %v1773 = vadd.f32 0.0, %v1772
          %1774 = vmatmul.bf16.gmra.mxu0 %v1692
          %v1775 = vpop.f32.mrf.mxu0
          %v1776 = vadd.f32 0.0, %v1775
          %v1777 = vpop.f32.mrf.mxu0
          %1778 = vdwg.mxu0
          %1779 = vmatpush.bf16.msra.mxu0 %v1744
          %1780 = vmatpush.bf16.msra.mxu0 %v1743
          %1781 = vmatpush.bf16.msra.mxu0 %v1742
          %1782 = vmatpush.bf16.msra.mxu0 %v1741
          %1783 = vmatpush.bf16.msra.mxu0 %v1740
          %1784 = vmatpush.bf16.msra.mxu0 %v1739
          %1785 = vmatpush.bf16.msra.mxu0 %v1738
          %1786 = vmatpush.bf16.msra.mxu0 %v1737
          %1787 = vmatmul.bf16.gmra.mxu0 %v1691
          %v1788 = vpop.f32.mrf.mxu0
          %v1789 = vadd.f32 %v1771, %v1788
          %v1790 = vpop.f32.mrf.mxu0
          %v1791 = vadd.f32 %v1773, %v1790
          %1792 = vmatmul.bf16.gmra.mxu0 %v1693
          %v1793 = vpop.f32.mrf.mxu0
          %v1794 = vadd.f32 %v1776, %v1793
          %v1795 = vpop.f32.mrf.mxu0
          %1796 = vdwg.mxu0
          %v1797 = vadd.f32 %v1694, %v1789
          %v1798 = vadd.f32 %v1695, %v1791
          %v1799 = vadd.f32 %v1696, %v1794
          %1800 = vst [vmem:[#allocation2] sm:$0xff] %v1797
          %1801 = vst [vmem:[#allocation2 + $0x8] sm:$0xff] %v1798
          %1802 = vst [vmem:[#allocation2 + $0x10] sm:$0xff] %v1799
        $region104: #{tpu_custom_call.1} parent=63 // pred_fallthru
          _
        %p1803 = scmp.gt.s32.totalorder %s1491, 2
        // Predicated region
        $region105: #{tpu_custom_call.1} parent=63 // pred_check
          %p1804 = pneg %p1803
        $region106: #{tpu_custom_call.1} parent=63 // pred_check_branch
          %1806 = sbr.rel (%p1804) target = $region108
        $region107: #{tpu_custom_call.1} parent=63 // pred_region
          %v1807 = vperm.slane %v1492, 2
          %v1808 = vperm.slane %v1492, 6
          %v1809 = vperm.slane %v1807, 2
          %v1810 = vperm.slane %v1808, 2
          %vm1811 = vcmp.eq.s32.totalorder %v1494, %v1809
          %vm1812 = vcmp.eq.s32.totalorder %v1494, %v1810
          %vm1813 = vcmp.eq.s32.totalorder %v1495, %v1809
          %vm1814 = vcmp.eq.s32.totalorder %v1495, %v1810
          %vm1815 = vcmp.eq.s32.totalorder %v1496, %v1809
          %vm1816 = vcmp.eq.s32.totalorder %v1496, %v1810
          %v1817 = vsel %vm1811, 1, 0
          %v1818 = vsel %vm1812, 1, 0
          %v1819 = vsel %vm1813, 1, 0
          %v1820 = vsel %vm1814, 1, 0
          %v1821 = vsel %vm1815, 1, 0
          %v1822 = vsel %vm1816, 1, 0
          %v1823 = vcvt.s32.f32 %v1817
          %v1824 = vcvt.s32.f32 %v1818
          %v1825 = vcvt.s32.f32 %v1819
          %v1826 = vcvt.s32.f32 %v1820
          %v1827 = vcvt.s32.f32 %v1821
          %v1828 = vcvt.s32.f32 %v1822
          %v1829 = vpack.c.bf16 %v1825, %v1823
          %v1830 = vpack.c.bf16 %v1826, %v1824
          %v1831 = vpack.c.bf16 %v1827, %v1827
          %v1832 = vpack.c.bf16 %v1828, %v1828
          %v1833 = vld [vmem:[#allocation2] sm:$0xff]
          %v1834 = vld [vmem:[#allocation2 + $0x8] sm:$0xff]
          %v1835 = vld [vmem:[#allocation2 + $0x10] sm:$0xff]
          %v1868 = vunpack.c.l.b16 %v1428
          %v1869 = vunpack.c.l.b16 %v1430
          %v1870 = vunpack.c.l.b16 %v1432
          %v1871 = vunpack.c.l.b16 %v1434
          %v1872 = vunpack.c.l.b16 %v1436
          %v1873 = vunpack.c.l.b16 %v1438
          %v1874 = vunpack.c.l.b16 %v1440
          %v1875 = vunpack.c.l.b16 %v1442
          %v1876 = vunpack.c.l.b16 %v1444
          %v1877 = vunpack.c.l.b16 %v1446
          %v1878 = vunpack.c.l.b16 %v1448
          %v1879 = vunpack.c.l.b16 %v1450
          %v1880 = vunpack.c.l.b16 %v1452
          %v1881 = vunpack.c.l.b16 %v1454
          %v1882 = vunpack.c.l.b16 %v1456
          %v1883 = vunpack.c.l.b16 %v1458
          %v1884 = vunpack.c.l.b16 %v1460
          %v1885 = vunpack.c.l.b16 %v1462
          %v1886 = vunpack.c.l.b16 %v1464
          %v1887 = vunpack.c.l.b16 %v1466
          %v1888 = vunpack.c.l.b16 %v1468
          %v1889 = vunpack.c.l.b16 %v1470
          %v1890 = vunpack.c.l.b16 %v1472
          %v1891 = vunpack.c.l.b16 %v1474
          %v1892 = vunpack.c.l.b16 %v1476
          %v1893 = vunpack.c.l.b16 %v1478
          %v1894 = vunpack.c.l.b16 %v1480
          %v1895 = vunpack.c.l.b16 %v1482
          %v1896 = vunpack.c.l.b16 %v1484
          %v1897 = vunpack.c.l.b16 %v1486
          %v1898 = vunpack.c.l.b16 %v1488
          %v1899 = vunpack.c.l.b16 %v1490
          %v1900 = vpack.c.b16 %v1869, %v1868
          %v1901 = vpack.c.b16 %v1871, %v1870
          %v1902 = vpack.c.b16 %v1873, %v1872
          %v1903 = vpack.c.b16 %v1875, %v1874
          %v1904 = vpack.c.b16 %v1877, %v1876
          %v1905 = vpack.c.b16 %v1879, %v1878
          %v1906 = vpack.c.b16 %v1881, %v1880
          %v1907 = vpack.c.b16 %v1883, %v1882
          %v1908 = vpack.c.b16 %v1885, %v1884
          %v1909 = vpack.c.b16 %v1887, %v1886
          %v1910 = vpack.c.b16 %v1889, %v1888
          %v1911 = vpack.c.b16 %v1891, %v1890
          %v1912 = vpack.c.b16 %v1893, %v1892
          %v1913 = vpack.c.b16 %v1895, %v1894
          %v1914 = vpack.c.b16 %v1897, %v1896
          %v1915 = vpack.c.b16 %v1899, %v1898
          %1932 = vmatpush.bf16.msra.mxu0 %v1907
          %1933 = vmatpush.bf16.msra.mxu0 %v1906
          %1934 = vmatpush.bf16.msra.mxu0 %v1905
          %1935 = vmatpush.bf16.msra.mxu0 %v1904
          %1936 = vmatpush.bf16.msra.mxu0 %v1903
          %1937 = vmatpush.bf16.msra.mxu0 %v1902
          %1938 = vmatpush.bf16.msra.mxu0 %v1901
          %1939 = vmatpush.bf16.msra.mxu0 %v1900
          %1940 = vmatmul.bf16.gmra.mxu0 %v1829
          %v1941 = vpop.f32.mrf.mxu0
          %v1942 = vadd.f32 0.0, %v1941
          %v1943 = vpop.f32.mrf.mxu0
          %v1944 = vadd.f32 0.0, %v1943
          %1945 = vmatmul.bf16.gmra.mxu0 %v1831
          %v1946 = vpop.f32.mrf.mxu0
          %v1947 = vadd.f32 0.0, %v1946
          %v1948 = vpop.f32.mrf.mxu0
          %1949 = vdwg.mxu0
          %1950 = vmatpush.bf16.msra.mxu0 %v1915
          %1951 = vmatpush.bf16.msra.mxu0 %v1914
          %1952 = vmatpush.bf16.msra.mxu0 %v1913
          %1953 = vmatpush.bf16.msra.mxu0 %v1912
          %1954 = vmatpush.bf16.msra.mxu0 %v1911
          %1955 = vmatpush.bf16.msra.mxu0 %v1910
          %1956 = vmatpush.bf16.msra.mxu0 %v1909
          %1957 = vmatpush.bf16.msra.mxu0 %v1908
          %1958 = vmatmul.bf16.gmra.mxu0 %v1830
          %v1959 = vpop.f32.mrf.mxu0
          %v1960 = vadd.f32 %v1942, %v1959
          %v1961 = vpop.f32.mrf.mxu0
          %v1962 = vadd.f32 %v1944, %v1961
          %1963 = vmatmul.bf16.gmra.mxu0 %v1832
          %v1964 = vpop.f32.mrf.mxu0
          %v1965 = vadd.f32 %v1947, %v1964
          %v1966 = vpop.f32.mrf.mxu0
          %1967 = vdwg.mxu0
          %v1968 = vadd.f32 %v1833, %v1960
          %v1969 = vadd.f32 %v1834, %v1962
          %v1970 = vadd.f32 %v1835, %v1965
          %1971 = vst [vmem:[#allocation2] sm:$0xff] %v1968
          %1972 = vst [vmem:[#allocation2 + $0x8] sm:$0xff] %v1969
          %1973 = vst [vmem:[#allocation2 + $0x10] sm:$0xff] %v1970
        $region108: #{tpu_custom_call.1} parent=63 // pred_fallthru
          _
        %p1974 = scmp.eq.s32.totalorder %s51, 2
        // Predicated region
        $region109: #{tpu_custom_call.1} parent=63 // pred_check
          %p1975 = pneg %p1974
        $region110: #{tpu_custom_call.1} parent=63 // pred_check_branch
          %1977 = sbr.rel (%p1975) target = $region112
        $region111: #{tpu_custom_call.1} parent=63 // pred_region
          %v1978 = vld [vmem:[#allocation17] sm:$0xf]
          %v1979 = vld [vmem:[#allocation17 + $0x4] sm:$0xf]
          %v1980 = vld [vmem:[#allocation17 + $0x8] sm:$0xf]
          %v1981 = vld [vmem:[#allocation17 + $0xc] sm:$0xf]
          %v1982 = vld [vmem:[#allocation17 + $0x10] sm:$0xf]
          %v1983 = vld [vmem:[#allocation17 + $0x14] sm:$0xf]
          %v1984 = vld [vmem:[#allocation17 + $0x18] sm:$0xf]
          %v1985 = vld [vmem:[#allocation17 + $0x1c] sm:$0xf]
          %v1986 = vld [vmem:[#allocation17 + $0x20] sm:$0xf]
          %v1987 = vld [vmem:[#allocation17 + $0x24] sm:$0xf]
          %v1988 = vld [vmem:[#allocation17 + $0x28] sm:$0xf]
          %v1989 = vld [vmem:[#allocation17 + $0x2c] sm:$0xf]
          %v1990 = vld [vmem:[#allocation17 + $0x30] sm:$0xf]
          %v1991 = vld [vmem:[#allocation17 + $0x34] sm:$0xf]
          %v1992 = vld [vmem:[#allocation17 + $0x38] sm:$0xf]
          %v1993 = vld [vmem:[#allocation17 + $0x3c] sm:$0xf]
          %v1994 = vld [vmem:[#allocation17 + $0x40] sm:$0xf]
          %v1995 = vld [vmem:[#allocation17 + $0x44] sm:$0xf]
          %v1996 = vld [vmem:[#allocation17 + $0x48] sm:$0xf]
          %v1997 = vld [vmem:[#allocation17 + $0x4c] sm:$0xf]
          %v1998 = vld [vmem:[#allocation17 + $0x50] sm:$0xf]
          %v1999 = vld [vmem:[#allocation17 + $0x54] sm:$0xf]
          %v2000 = vld [vmem:[#allocation17 + $0x58] sm:$0xf]
          %v2001 = vld [vmem:[#allocation17 + $0x5c] sm:$0xf]
          %v2002 = vld [vmem:[#allocation17 + $0x60] sm:$0xf]
          %v2003 = vld [vmem:[#allocation17 + $0x64] sm:$0xf]
          %v2004 = vld [vmem:[#allocation17 + $0x68] sm:$0xf]
          %v2005 = vld [vmem:[#allocation17 + $0x6c] sm:$0xf]
          %v2006 = vld [vmem:[#allocation17 + $0x70] sm:$0xf]
          %v2007 = vld [vmem:[#allocation17 + $0x74] sm:$0xf]
          %v2008 = vld [vmem:[#allocation17 + $0x78] sm:$0xf]
          %v2009 = vld [vmem:[#allocation17 + $0x7c] sm:$0xf]
          %v2010 = vld [vmem:[#allocation2] sm:$0xff]
          %v2011 = vld [vmem:[#allocation2 + $0x8] sm:$0xff]
          %v2012 = vld [vmem:[#allocation2 + $0x10] sm:$0xff]
          %v2013 = vpack.c.bf16 %v2011, %v2010
          %v2014 = vpack.c.bf16 %v2012, %v2012
          %v2015 = vld [vmem:[#allocation11] sm:$0xf]
          %v2016 = vld [vmem:[#allocation11 + $0x4] sm:$0xf]
          %v2017 = vld [vmem:[#allocation11 + $0x8] sm:$0xf]
          %v2021 = vunpack.c.l.b16 %v2015
          %v2022 = vunpack.c.l.b16 %v2016
          %v2023 = vunpack.c.l.b16 %v2017
          %v2024 = vpack.c.b16 %v2022, %v2021
          %v2025 = vpack.c.b16 %v2023, %v2023
          %v2044 = vunpack.c.l.b16 %v1994
          %v2045 = vunpack.c.l.b16 %v1995
          %v2046 = vunpack.c.l.b16 %v1996
          %v2047 = vunpack.c.l.b16 %v1997
          %v2048 = vunpack.c.l.b16 %v1998
          %v2049 = vunpack.c.l.b16 %v1999
          %v2050 = vunpack.c.l.b16 %v2000
          %v2051 = vunpack.c.l.b16 %v2001
          %v2052 = vunpack.c.l.b16 %v2002
          %v2053 = vunpack.c.l.b16 %v2003
          %v2054 = vunpack.c.l.b16 %v2004
          %v2055 = vunpack.c.l.b16 %v2005
          %v2056 = vunpack.c.l.b16 %v2006
          %v2057 = vunpack.c.l.b16 %v2007
          %v2058 = vunpack.c.l.b16 %v2008
          %v2059 = vunpack.c.l.b16 %v2009
          %v2060 = vpack.c.b16 %v2045, %v2044
          %v2061 = vpack.c.b16 %v2047, %v2046
          %v2062 = vpack.c.b16 %v2049, %v2048
          %v2063 = vpack.c.b16 %v2051, %v2050
          %v2064 = vpack.c.b16 %v2053, %v2052
          %v2065 = vpack.c.b16 %v2055, %v2054
          %v2066 = vpack.c.b16 %v2057, %v2056
          %v2067 = vpack.c.b16 %v2059, %v2058
          %2076 = vmatpush.bf16.msra.mxu0 %v2067
          %2077 = vmatpush.bf16.msra.mxu0 %v2066
          %2078 = vmatpush.bf16.msra.mxu0 %v2065
          %2079 = vmatpush.bf16.msra.mxu0 %v2064
          %2080 = vmatpush.bf16.msra.mxu0 %v2063
          %2081 = vmatpush.bf16.msra.mxu0 %v2062
          %2082 = vmatpush.bf16.msra.mxu0 %v2061
          %2083 = vmatpush.bf16.msra.mxu0 %v2060
          %2084 = vmatmul.bf16.gmra.mxu0 %v2024
          %v2085 = vpop.f32.mrf.mxu0
          %v2086 = vadd.f32 0.0, %v2085
          %v2087 = vpop.f32.mrf.mxu0
          %v2088 = vadd.f32 0.0, %v2087
          %2089 = vmatmul.bf16.gmra.mxu0 %v2025
          %v2090 = vpop.f32.mrf.mxu0
          %v2091 = vadd.f32 0.0, %v2090
          %v2092 = vpop.f32.mrf.mxu0
          %2093 = vdwg.mxu0
          %v2110 = vunpack.c.l.b16 %v1978
          %v2111 = vunpack.c.l.b16 %v1979
          %v2112 = vunpack.c.l.b16 %v1980
          %v2113 = vunpack.c.l.b16 %v1981
          %v2114 = vunpack.c.l.b16 %v1982
          %v2115 = vunpack.c.l.b16 %v1983
          %v2116 = vunpack.c.l.b16 %v1984
          %v2117 = vunpack.c.l.b16 %v1985
          %v2118 = vunpack.c.l.b16 %v1986
          %v2119 = vunpack.c.l.b16 %v1987
          %v2120 = vunpack.c.l.b16 %v1988
          %v2121 = vunpack.c.l.b16 %v1989
          %v2122 = vunpack.c.l.b16 %v1990
          %v2123 = vunpack.c.l.b16 %v1991
          %v2124 = vunpack.c.l.b16 %v1992
          %v2125 = vunpack.c.l.b16 %v1993
          %v2126 = vpack.c.b16 %v2111, %v2110
          %v2127 = vpack.c.b16 %v2113, %v2112
          %v2128 = vpack.c.b16 %v2115, %v2114
          %v2129 = vpack.c.b16 %v2117, %v2116
          %v2130 = vpack.c.b16 %v2119, %v2118
          %v2131 = vpack.c.b16 %v2121, %v2120
          %v2132 = vpack.c.b16 %v2123, %v2122
          %v2133 = vpack.c.b16 %v2125, %v2124
          %2142 = vmatpush.bf16.msra.mxu0 %v2133
          %2143 = vmatpush.bf16.msra.mxu0 %v2132
          %2144 = vmatpush.bf16.msra.mxu0 %v2131
          %2145 = vmatpush.bf16.msra.mxu0 %v2130
          %2146 = vmatpush.bf16.msra.mxu0 %v2129
          %2147 = vmatpush.bf16.msra.mxu0 %v2128
          %2148 = vmatpush.bf16.msra.mxu0 %v2127
          %2149 = vmatpush.bf16.msra.mxu0 %v2126
          %2150 = vmatmul.bf16.gmra.mxu0 %v2013
          %v2151 = vpop.f32.mrf.mxu0
          %v2152 = vadd.f32 %v2086, %v2151
          %v2153 = vpop.f32.mrf.mxu0
          %v2154 = vadd.f32 %v2088, %v2153
          %2155 = vmatmul.bf16.gmra.mxu0 %v2014
          %v2156 = vpop.f32.mrf.mxu0
          %v2157 = vadd.f32 %v2091, %v2156
          %v2158 = vpop.f32.mrf.mxu0
          %2159 = vdwg.mxu0
          %v2160 = vld [vmem:[%s10] sm:$0x1]
          %v2162 = vperm.slane %v2160, 0
          %v2164 = vadd.f32 %v2152, %v2162
          %v2165 = vadd.f32 %v2154, %v2162
          %v2166 = vadd.f32 %v2157, %v2162
          %v2167 = vmax.f32 %v2164, 0.0
          %v2168 = vmax.f32 %v2165, 0.0
          %v2169 = vmax.f32 %v2166, 0.0
          %v2170 = vpack.c.bf16 %v2168, %v2167
          %v2171 = vpack.c.bf16 %v2169, %v2169
          %v2172 = vld [vmem:[#allocation18] sm:$0xf]
          %v2173 = vld [vmem:[#allocation18 + $0x4] sm:$0xf]
          %v2174 = vld [vmem:[#allocation18 + $0x8] sm:$0xf]
          %v2175 = vld [vmem:[#allocation18 + $0xc] sm:$0xf]
          %v2176 = vld [vmem:[#allocation18 + $0x10] sm:$0xf]
          %v2177 = vld [vmem:[#allocation18 + $0x14] sm:$0xf]
          %v2178 = vld [vmem:[#allocation18 + $0x18] sm:$0xf]
          %v2179 = vld [vmem:[#allocation18 + $0x1c] sm:$0xf]
          %v2180 = vld [vmem:[#allocation18 + $0x20] sm:$0xf]
          %v2181 = vld [vmem:[#allocation18 + $0x24] sm:$0xf]
          %v2182 = vld [vmem:[#allocation18 + $0x28] sm:$0xf]
          %v2183 = vld [vmem:[#allocation18 + $0x2c] sm:$0xf]
          %v2184 = vld [vmem:[#allocation18 + $0x30] sm:$0xf]
          %v2185 = vld [vmem:[#allocation18 + $0x34] sm:$0xf]
          %v2186 = vld [vmem:[#allocation18 + $0x38] sm:$0xf]
          %v2187 = vld [vmem:[#allocation18 + $0x3c] sm:$0xf]
          %v2188 = vld [vmem:[%s12] sm:$0x1]
          %v2190 = vperm.slane %v2188, 0
          %v2208 = vunpack.c.l.b16 %v2172
          %v2209 = vunpack.c.l.b16 %v2173
          %v2210 = vunpack.c.l.b16 %v2174
          %v2211 = vunpack.c.l.b16 %v2175
          %v2212 = vunpack.c.l.b16 %v2176
          %v2213 = vunpack.c.l.b16 %v2177
          %v2214 = vunpack.c.l.b16 %v2178
          %v2215 = vunpack.c.l.b16 %v2179
          %v2216 = vunpack.c.l.b16 %v2180
          %v2217 = vunpack.c.l.b16 %v2181
          %v2218 = vunpack.c.l.b16 %v2182
          %v2219 = vunpack.c.l.b16 %v2183
          %v2220 = vunpack.c.l.b16 %v2184
          %v2221 = vunpack.c.l.b16 %v2185
          %v2222 = vunpack.c.l.b16 %v2186
          %v2223 = vunpack.c.l.b16 %v2187
          %v2224 = vpack.c.b16 %v2209, %v2208
          %v2225 = vpack.c.b16 %v2211, %v2210
          %v2226 = vpack.c.b16 %v2213, %v2212
          %v2227 = vpack.c.b16 %v2215, %v2214
          %v2228 = vpack.c.b16 %v2217, %v2216
          %v2229 = vpack.c.b16 %v2219, %v2218
          %v2230 = vpack.c.b16 %v2221, %v2220
          %v2231 = vpack.c.b16 %v2223, %v2222
          %2240 = vmatpush.bf16.msra.mxu0 %v2231
          %2241 = vmatpush.bf16.msra.mxu0 %v2230
          %2242 = vmatpush.bf16.msra.mxu0 %v2229
          %2243 = vmatpush.bf16.msra.mxu0 %v2228
          %2244 = vmatpush.bf16.msra.mxu0 %v2227
          %2245 = vmatpush.bf16.msra.mxu0 %v2226
          %2246 = vmatpush.bf16.msra.mxu0 %v2225
          %2247 = vmatpush.bf16.msra.mxu0 %v2224
          %2248 = vmatmul.bf16.gmra.mxu0 %v2170
          %v2249 = vpop.f32.mrf.mxu0
          %v2250 = vadd.f32 %v2190, %v2249
          %v2251 = vpop.f32.mrf.mxu0
          %v2252 = vadd.f32 %v2190, %v2251
          %2253 = vmatmul.bf16.gmra.mxu0 %v2171
          %v2254 = vpop.f32.mrf.mxu0
          %v2255 = vadd.f32 %v2190, %v2254
          %v2256 = vpop.f32.mrf.mxu0
          %2257 = vdwg.mxu0
          %v2258 = vpack.c.bf16 %v2250, %v2250
          %v2259 = vpack.c.bf16 %v2252, %v2252
          %v2260 = vpack.c.bf16 %v2255, %v2255
          %2261 = vst [vmem:[#allocation20] sm:$0xf] %v2258
          %2262 = vst [vmem:[#allocation20 + $0x4] sm:$0xf] %v2259
          %2263 = vst [vmem:[#allocation20 + $0x8] sm:$0xf] %v2260
        $region112: #{tpu_custom_call.1} parent=63 // pred_fallthru
          _
        // Predicated region
        $region113: #{tpu_custom_call.1} parent=63 // pred_check
          %p2264 = pneg %p333
        $region114: #{tpu_custom_call.1} parent=63 // pred_check_branch
          %2266 = sbr.rel (%p2264) target = $region116
        $region115: #{tpu_custom_call.1} parent=63 // pred_region
          %2268 = vsyncadd [#allocation8], 0
          %s2269 = sshll.u32 [#allocation20], 4
          %s2270 = int_to_ptr.vmem [resolvable:$true] %s2269
          %s2271 = sshll.u32 %s13, 4
          %s2272 = int_to_ptr.hbm [resolvable:$true] %s2271
          %2277 = dma.vmem_to_hbm [thread:$0]  %s2270, 192, %s2272, [#allocation8], 64, 64, 4
        $region116: #{tpu_custom_call.1} parent=63 // pred_fallthru
          _
        // Predicated region
        $region117: #{tpu_custom_call.1} parent=63 // pred_check
          %p2278 = pneg %p333
        $region118: #{tpu_custom_call.1} parent=63 // pred_check_branch
          %2280 = sbr.rel (%p2278) target = $region120
        $region119: #{tpu_custom_call.1} parent=63 // pred_region
          %2282 = dma.done [#allocation8], 192
        $region120: #{tpu_custom_call.1} parent=63 // pred_fallthru
          _
      $region64: #{tpu_custom_call.1} parent=5 // pred_fallthru
        _
      %p2283 = scmp.le.s32.totalorder 2, %s46
      // Predicated region
      $region121: #{tpu_custom_call.1} parent=5 // pred_check
        %p2284 = pneg %p2283
      $region122: #{tpu_custom_call.1} parent=5 // pred_check_branch
        %2286 = sbr.rel (%p2284) target = $region124
      $region123: #{tpu_custom_call.1} parent=5 // pred_region
        %s2287 = ssub.s32 %s46, 2
      $region124: #{tpu_custom_call.1} parent=5 // pred_fallthru
        _
    $region6: #{tpu_custom_call.1} parent=1 // loop_footer
      %s50 = sadd.s32 1, %s46
    $region7: #{tpu_custom_call.1} parent=1 // loop_footer_branch
      %45 = sbr.rel target = $region3
    $region8: #{tpu_custom_call.1} parent=1 // loop_exit
      _
    %2288 = vsyncpa [#allocation7], 1
    %s2289 = scalar_lea.sflag [#allocation7], 1
    %2290 = vsyncpa %s2289, 1
    %2291 = vsyncpa [#allocation10], 1
    %s2292 = scalar_lea.sflag [#allocation10], 1
    %2293 = vsyncpa %s2292, 1
    %2294 = vsyncpa [#allocation13], 1
    %s2295 = scalar_lea.sflag [#allocation13], 1
    %2296 = vsyncpa %s2295, 1
    %2297 = vsyncpa [#allocation16], 1
    %s2298 = scalar_lea.sflag [#allocation16], 1
    %2299 = vsyncpa %s2298, 1
    %2300 = vsyncpa [#allocation19], 1
    %2301 = vsyncpa [#allocation8], 1
    %s2302 = scalar_lea.sflag [#allocation8], 1
    %2303 = vsyncpa %s2302, 1

</llo_original>
